<compile_context>
chip_gen: v6e
topology: v6e:2x2x1
jax: 0.10.0
libtpu: 0.0.40
codegen_flags: <defaults>
</compile_context>

<pallas_src>
import jax
import jax.numpy as jnp
from jax.experimental import pallas as pl
from jax.experimental.pallas import tpu as pltpu

LANE = 128
NEG_SLOPE = 0.01  # F.leaky_relu default negative_slope


def _leaky_relu(x, slope=NEG_SLOPE):
    return jnp.where(x > 0, x, slope * x)


def _round_up(x, m):
    return (x + m - 1) // m * m


def dueling_dqn_kernel(
    x_ref,
    w1_ref, b1_ref,
    w2_ref, b2_ref,
    w3_ref, b3_ref,
    w4_ref, b4_ref,
    w5_ref, b5_ref,
    wh_ref, bh_ref,
    head_ref,
):
    h = x_ref[...]
    for w_ref, b_ref in ((w1_ref, b1_ref), (w2_ref, b2_ref),
                         (w3_ref, b3_ref), (w4_ref, b4_ref)):
        h = _leaky_relu(
            jnp.dot(h, w_ref[...], preferred_element_type=jnp.float32)
            + b_ref[...])
    # fc5 (no activation), then the fused V|A head in a single MXU pass.
    flat = jnp.dot(h, w5_ref[...], preferred_element_type=jnp.float32) + b5_ref[...]
    head_ref[...] = (
        jnp.dot(flat, wh_ref[...], preferred_element_type=jnp.float32)
        + bh_ref[...]).astype(head_ref.dtype)


def _choose_blocking(batch):
    """Pick (padded_batch, block_m): fill the MXU rows, keep >=2 grid steps
    for v7x's two TensorCores when the batch is large enough."""
    if batch >= 512:
        block_m = 256            # full 256-row MXU on v6e/v7x
    elif batch >= 256:
        block_m = 128
    else:
        bp = _round_up(max(batch, 8), 8)
        return bp, bp            # single grid step over the whole small batch
    return _round_up(batch, block_m), block_m


@jax.jit
def dueling_dqn_forward(state, params):
    """Fused Dueling-DQN forward pass. Returns (V, A) like the PyTorch module."""
    B, in_dim = state.shape
    H = params["w1"].shape[1]
    n_actions = params["wA"].shape[1]
    head_width = _round_up(n_actions + 1, LANE)   # lane-dense fused V|A output

    b_pad, block_m = _choose_blocking(B)
    in_pad = _round_up(in_dim, LANE)

    # --- wrapper-side layout plumbing (zero padding, head fusion) -----------
    x = state.astype(jnp.float32)
    if (b_pad, in_pad) != (B, in_dim):
        x = jnp.pad(x, ((0, b_pad - B), (0, in_pad - in_dim)))

    w1 = params["w1"]
    if in_pad != in_dim:
        w1 = jnp.pad(w1, ((0, in_pad - in_dim), (0, 0)))  # zero rows: no effect on dot

    # Fuse V (H,1) and A (H,n_actions) into one (H, head_width) weight.
    w_head = jnp.concatenate([params["wV"], params["wA"]], axis=1)
    b_head = jnp.concatenate([params["bV"], params["bA"]], axis=1)
    pad_cols = head_width - (n_actions + 1)
    w_head = jnp.pad(w_head, ((0, 0), (0, pad_cols)))
    b_head = jnp.pad(b_head, ((0, 0), (0, pad_cols)))

    layers = [
        (w1, params["b1"]),
        (params["w2"], params["b2"]),
        (params["w3"], params["b3"]),
        (params["w4"], params["b4"]),
        (params["w5"], params["b5"]),
        (w_head, b_head),
    ]

    # --- specs ---------------------------------------------------------------
    # Weights/biases: constant block index across the grid -> single buffer.
    def const_spec(shape):
        return pl.BlockSpec(shape, lambda i: (0, 0), pipeline_mode=pl.Buffered(1))

    in_specs = [pl.BlockSpec((block_m, in_pad), lambda i: (i, 0))]
    args = [x]
    for w, b in layers:
        in_specs.append(const_spec(w.shape))
        in_specs.append(const_spec(b.shape))
        args.append(w)
        args.append(b)

    out_spec = pl.BlockSpec((block_m, head_width), lambda i: (i, 0))
    grid = (b_pad // block_m,)

    # --- explicit VMEM budget (weights single-buffered, x/out double-buffered,
    # plus activation intermediates + compiler scratch headroom) --------------
    weight_bytes = sum(w.size * w.dtype.itemsize + b.size * b.dtype.itemsize
                       for w, b in layers)
    io_bytes = 2 * 4 * block_m * (in_pad + head_width)
    act_bytes = 4 * 4 * block_m * max(H, in_pad, head_width)
    vmem_limit = min(100 * 1024 * 1024,
                     max(32 * 1024 * 1024,
                         int(1.5 * (weight_bytes + io_bytes + act_bytes)) + (8 << 20)))
    # NOTE: if n_neurons is scaled up past what fits v7x's 64 MiB VMEM, store the
    # weights in bfloat16 (keep preferred_element_type=f32) or tile the K axis.

    head = pl.pallas_call(
        dueling_dqn_kernel,
        out_shape=jax.ShapeDtypeStruct((b_pad, head_width), jnp.float32),
        grid_spec=pltpu.PrefetchScalarGridSpec(
            num_scalar_prefetch=0,
            grid=grid,
            in_specs=in_specs,
            out_specs=out_spec,
        ),
        compiler_params=pltpu.CompilerParams(
            dimension_semantics=("parallel",),
            vmem_limit_bytes=vmem_limit,
        ),
    )(*args)

    V = head[:B, 0:1]
    A = head[:B, 1:1 + n_actions]
    return V, A


# ----------------------------- init (matches PyTorch) -------------------------

def xavier_uniform(key, fan_in, fan_out, dtype=jnp.float32):
    # nn.init.xavier_uniform_ with gain=1
    limit = jnp.sqrt(6.0 / (fan_in + fan_out))
    return jax.random.uniform(key, (fan_in, fan_out), dtype, -limit, limit)


def linear_bias(key, fan_in, fan_out, dtype=jnp.float32):
    # PyTorch Linear default bias init: U(-1/sqrt(fan_in), 1/sqrt(fan_in))
    bound = 1.0 / jnp.sqrt(float(fan_in))
    return jax.random.uniform(key, (1, fan_out), dtype, -bound, bound)


def init_params(key, input_dims, n_neurons, n_actions):
    keys = jax.random.split(key, 14)
    layer_dims = [
        ("w1", "b1", input_dims, n_neurons),
        ("w2", "b2", n_neurons, n_neurons),
        ("w3", "b3", n_neurons, n_neurons),
        ("w4", "b4", n_neurons, n_neurons),
        ("w5", "b5", n_neurons, n_neurons),
        ("wV", "bV", n_neurons, 1),
        ("wA", "bA", n_neurons, n_actions),
    ]
    params = {}
    for i, (wn, bn, fi, fo) in enumerate(layer_dims):
        # Weights stored as (in, out) == transpose of PyTorch (out, in).
        params[wn] = xavier_uniform(keys[2 * i], fi, fo)
        params[bn] = linear_bias(keys[2 * i + 1], fi, fo)
    return params


if __name__ == "__main__":
    # Small, module-consistent shapes (replay-buffer sized batch to exercise the
    # 256-row blocking and the 2-step parallel grid).
    batch = 512
    input_dims = 32
    n_neurons = 128   # stand-in for n_neurons_layer=512 at small scale
    n_actions = 4

    key = jax.random.PRNGKey(0)
    pkey, xkey = jax.random.split(key)
    params = init_params(pkey, input_dims, n_neurons, n_actions)
    state = jax.random.normal(xkey, (batch, input_dims), dtype=jnp.float32)

    V, A = dueling_dqn_forward(state, params)
    V = jax.block_until_ready(V)
    A = jax.block_until_ready(A)

    # Cross-check against a pure-JAX reference of the same math.
    def ref(x, p):
        h = x
        for w, b in [("w1", "b1"), ("w2", "b2"), ("w3", "b3"), ("w4", "b4")]:
            h = _leaky_relu(h @ p[w] + p[b])
        flat = h @ p["w5"] + p["b5"]
        return flat @ p["wV"] + p["bV"], flat @ p["wA"] + p["bA"]

    V_ref, A_ref = ref(state, params)
    assert V.shape == (batch, 1) and A.shape == (batch, n_actions)
    assert jnp.allclose(V, V_ref, atol=1e-3, rtol=1e-3)
    assert jnp.allclose(A, A_ref, atol=1e-3, rtol=1e-3)

    print("KERNEL_OK")
</pallas_src>

<mosaic_0001>
module attributes {stable_mosaic.version = 11 : i64} {
  func.func @dueling_dqn_kernel(%arg0: i32, %arg1: memref<256x128xf32, #tpu.memory_space<vmem>>, %arg2: memref<128x128xf32, #tpu.memory_space<vmem>>, %arg3: memref<1x128xf32, #tpu.memory_space<vmem>>, %arg4: memref<128x128xf32, #tpu.memory_space<vmem>>, %arg5: memref<1x128xf32, #tpu.memory_space<vmem>>, %arg6: memref<128x128xf32, #tpu.memory_space<vmem>>, %arg7: memref<1x128xf32, #tpu.memory_space<vmem>>, %arg8: memref<128x128xf32, #tpu.memory_space<vmem>>, %arg9: memref<1x128xf32, #tpu.memory_space<vmem>>, %arg10: memref<128x128xf32, #tpu.memory_space<vmem>>, %arg11: memref<1x128xf32, #tpu.memory_space<vmem>>, %arg12: memref<128x128xf32, #tpu.memory_space<vmem>>, %arg13: memref<1x128xf32, #tpu.memory_space<vmem>>, %arg14: memref<256x128xf32, #tpu.memory_space<vmem>>) attributes {dimension_semantics = [#tpu.dimension_semantics<parallel>], iteration_bounds = array<i64: 2>, scalar_prefetch = 0 : i64, scratch_operands = 0 : i64, tpu.core_type = #tpu.core_type<tc>, window_params = [{transform_indices = @transform_0, window_bounds = array<i64: 256, 128>}, {pipeline_mode = #tpu.pipeline_mode<synchronous>, transform_indices = @transform_1, window_bounds = array<i64: 128, 128>}, {pipeline_mode = #tpu.pipeline_mode<synchronous>, transform_indices = @transform_2, window_bounds = array<i64: 1, 128>}, {pipeline_mode = #tpu.pipeline_mode<synchronous>, transform_indices = @transform_3, window_bounds = array<i64: 128, 128>}, {pipeline_mode = #tpu.pipeline_mode<synchronous>, transform_indices = @transform_4, window_bounds = array<i64: 1, 128>}, {pipeline_mode = #tpu.pipeline_mode<synchronous>, transform_indices = @transform_5, window_bounds = array<i64: 128, 128>}, {pipeline_mode = #tpu.pipeline_mode<synchronous>, transform_indices = @transform_6, window_bounds = array<i64: 1, 128>}, {pipeline_mode = #tpu.pipeline_mode<synchronous>, transform_indices = @transform_7, window_bounds = array<i64: 128, 128>}, {pipeline_mode = #tpu.pipeline_mode<synchronous>, transform_indices = @transform_8, window_bounds = array<i64: 1, 128>}, {pipeline_mode = #tpu.pipeline_mode<synchronous>, transform_indices = @transform_9, window_bounds = array<i64: 128, 128>}, {pipeline_mode = #tpu.pipeline_mode<synchronous>, transform_indices = @transform_10, window_bounds = array<i64: 1, 128>}, {pipeline_mode = #tpu.pipeline_mode<synchronous>, transform_indices = @transform_11, window_bounds = array<i64: 128, 128>}, {pipeline_mode = #tpu.pipeline_mode<synchronous>, transform_indices = @transform_12, window_bounds = array<i64: 1, 128>}, {transform_indices = @transform_13, window_bounds = array<i64: 256, 128>}]} {
    %c0 = arith.constant 0 : index
    %c0_0 = arith.constant 0 : index
    %0 = vector.load %arg1[%c0, %c0_0] : memref<256x128xf32, #tpu.memory_space<vmem>>, vector<256x128xf32>
    %c0_1 = arith.constant 0 : index
    %c0_2 = arith.constant 0 : index
    %1 = vector.load %arg2[%c0_1, %c0_2] : memref<128x128xf32, #tpu.memory_space<vmem>>, vector<128x128xf32>
    %cst = arith.constant dense<0.000000e+00> : vector<256x128xf32>
    %2 = tpu.matmul %0, %1, %cst {dimension_numbers = #tpu.dot_dimension_numbers<[1], [0], [0], [1], [0, 0, 1, 1], [], []>} : vector<256x128xf32>, vector<128x128xf32>, vector<256x128xf32> -> vector<256x128xf32>
    %c0_3 = arith.constant 0 : index
    %c0_4 = arith.constant 0 : index
    %3 = vector.load %arg3[%c0_3, %c0_4] : memref<1x128xf32, #tpu.memory_space<vmem>>, vector<1x128xf32>
    %4 = vector.broadcast %3 : vector<1x128xf32> to vector<256x128xf32>
    %5 = arith.addf %2, %4 : vector<256x128xf32>
    %cst_5 = arith.constant 0.000000e+00 : f32
    %6 = vector.broadcast %cst_5 : f32 to vector<256x128xf32>
    %7 = arith.cmpf ogt, %5, %6 : vector<256x128xf32>
    %cst_6 = arith.constant 0.00999999977 : f32
    %8 = vector.broadcast %cst_6 : f32 to vector<256x128xf32>
    %9 = arith.mulf %8, %5 : vector<256x128xf32>
    %10 = arith.select %7, %5, %9 : vector<256x128xi1>, vector<256x128xf32>
    %c0_7 = arith.constant 0 : index
    %c0_8 = arith.constant 0 : index
    %11 = vector.load %arg4[%c0_7, %c0_8] : memref<128x128xf32, #tpu.memory_space<vmem>>, vector<128x128xf32>
    %cst_9 = arith.constant dense<0.000000e+00> : vector<256x128xf32>
    %12 = tpu.matmul %10, %11, %cst_9 {dimension_numbers = #tpu.dot_dimension_numbers<[1], [0], [0], [1], [0, 0, 1, 1], [], []>} : vector<256x128xf32>, vector<128x128xf32>, vector<256x128xf32> -> vector<256x128xf32>
    %c0_10 = arith.constant 0 : index
    %c0_11 = arith.constant 0 : index
    %13 = vector.load %arg5[%c0_10, %c0_11] : memref<1x128xf32, #tpu.memory_space<vmem>>, vector<1x128xf32>
    %14 = vector.broadcast %13 : vector<1x128xf32> to vector<256x128xf32>
    %15 = arith.addf %12, %14 : vector<256x128xf32>
    %cst_12 = arith.constant 0.000000e+00 : f32
    %16 = vector.broadcast %cst_12 : f32 to vector<256x128xf32>
    %17 = arith.cmpf ogt, %15, %16 : vector<256x128xf32>
    %cst_13 = arith.constant 0.00999999977 : f32
    %18 = vector.broadcast %cst_13 : f32 to vector<256x128xf32>
    %19 = arith.mulf %18, %15 : vector<256x128xf32>
    %20 = arith.select %17, %15, %19 : vector<256x128xi1>, vector<256x128xf32>
    %c0_14 = arith.constant 0 : index
    %c0_15 = arith.constant 0 : index
    %21 = vector.load %arg6[%c0_14, %c0_15] : memref<128x128xf32, #tpu.memory_space<vmem>>, vector<128x128xf32>
    %cst_16 = arith.constant dense<0.000000e+00> : vector<256x128xf32>
    %22 = tpu.matmul %20, %21, %cst_16 {dimension_numbers = #tpu.dot_dimension_numbers<[1], [0], [0], [1], [0, 0, 1, 1], [], []>} : vector<256x128xf32>, vector<128x128xf32>, vector<256x128xf32> -> vector<256x128xf32>
    %c0_17 = arith.constant 0 : index
    %c0_18 = arith.constant 0 : index
    %23 = vector.load %arg7[%c0_17, %c0_18] : memref<1x128xf32, #tpu.memory_space<vmem>>, vector<1x128xf32>
    %24 = vector.broadcast %23 : vector<1x128xf32> to vector<256x128xf32>
    %25 = arith.addf %22, %24 : vector<256x128xf32>
    %cst_19 = arith.constant 0.000000e+00 : f32
    %26 = vector.broadcast %cst_19 : f32 to vector<256x128xf32>
    %27 = arith.cmpf ogt, %25, %26 : vector<256x128xf32>
    %cst_20 = arith.constant 0.00999999977 : f32
    %28 = vector.broadcast %cst_20 : f32 to vector<256x128xf32>
    %29 = arith.mulf %28, %25 : vector<256x128xf32>
    %30 = arith.select %27, %25, %29 : vector<256x128xi1>, vector<256x128xf32>
    %c0_21 = arith.constant 0 : index
    %c0_22 = arith.constant 0 : index
    %31 = vector.load %arg8[%c0_21, %c0_22] : memref<128x128xf32, #tpu.memory_space<vmem>>, vector<128x128xf32>
    %cst_23 = arith.constant dense<0.000000e+00> : vector<256x128xf32>
    %32 = tpu.matmul %30, %31, %cst_23 {dimension_numbers = #tpu.dot_dimension_numbers<[1], [0], [0], [1], [0, 0, 1, 1], [], []>} : vector<256x128xf32>, vector<128x128xf32>, vector<256x128xf32> -> vector<256x128xf32>
    %c0_24 = arith.constant 0 : index
    %c0_25 = arith.constant 0 : index
    %33 = vector.load %arg9[%c0_24, %c0_25] : memref<1x128xf32, #tpu.memory_space<vmem>>, vector<1x128xf32>
    %34 = vector.broadcast %33 : vector<1x128xf32> to vector<256x128xf32>
    %35 = arith.addf %32, %34 : vector<256x128xf32>
    %cst_26 = arith.constant 0.000000e+00 : f32
    %36 = vector.broadcast %cst_26 : f32 to vector<256x128xf32>
    %37 = arith.cmpf ogt, %35, %36 : vector<256x128xf32>
    %cst_27 = arith.constant 0.00999999977 : f32
    %38 = vector.broadcast %cst_27 : f32 to vector<256x128xf32>
    %39 = arith.mulf %38, %35 : vector<256x128xf32>
    %40 = arith.select %37, %35, %39 : vector<256x128xi1>, vector<256x128xf32>
    %c0_28 = arith.constant 0 : index
    %c0_29 = arith.constant 0 : index
    %41 = vector.load %arg10[%c0_28, %c0_29] : memref<128x128xf32, #tpu.memory_space<vmem>>, vector<128x128xf32>
    %cst_30 = arith.constant dense<0.000000e+00> : vector<256x128xf32>
    %42 = tpu.matmul %40, %41, %cst_30 {dimension_numbers = #tpu.dot_dimension_numbers<[1], [0], [0], [1], [0, 0, 1, 1], [], []>} : vector<256x128xf32>, vector<128x128xf32>, vector<256x128xf32> -> vector<256x128xf32>
    %c0_31 = arith.constant 0 : index
    %c0_32 = arith.constant 0 : index
    %43 = vector.load %arg11[%c0_31, %c0_32] : memref<1x128xf32, #tpu.memory_space<vmem>>, vector<1x128xf32>
    %44 = vector.broadcast %43 : vector<1x128xf32> to vector<256x128xf32>
    %45 = arith.addf %42, %44 : vector<256x128xf32>
    %c0_33 = arith.constant 0 : index
    %c0_34 = arith.constant 0 : index
    %46 = vector.load %arg12[%c0_33, %c0_34] : memref<128x128xf32, #tpu.memory_space<vmem>>, vector<128x128xf32>
    %cst_35 = arith.constant dense<0.000000e+00> : vector<256x128xf32>
    %47 = tpu.matmul %45, %46, %cst_35 {dimension_numbers = #tpu.dot_dimension_numbers<[1], [0], [0], [1], [0, 0, 1, 1], [], []>} : vector<256x128xf32>, vector<128x128xf32>, vector<256x128xf32> -> vector<256x128xf32>
    %c0_36 = arith.constant 0 : index
    %c0_37 = arith.constant 0 : index
    %48 = vector.load %arg13[%c0_36, %c0_37] : memref<1x128xf32, #tpu.memory_space<vmem>>, vector<1x128xf32>
    %49 = vector.broadcast %48 : vector<1x128xf32> to vector<256x128xf32>
    %50 = arith.addf %47, %49 : vector<256x128xf32>
    %c0_38 = arith.constant 0 : index
    %c0_39 = arith.constant 0 : index
    %51 = vector.load %arg14[%c0_38, %c0_39] : memref<256x128xf32, #tpu.memory_space<vmem>>, vector<256x128xf32>
    tpu.vector_store %arg14[%c0_38, %c0_39], %50 {strides = array<i32>} : memref<256x128xf32, #tpu.memory_space<vmem>>, vector<256x128xf32>,
    return
  }
  func.func @transform_0(%arg0: i32) -> (i32, i32) {
    %c0_i32 = arith.constant 0 : i32
    %c0_i32_0 = arith.constant 0 : i32
    return %arg0, %c0_i32 : i32, i32
  }
  func.func @transform_1(%arg0: i32) -> (i32, i32) {
    %c0_i32 = arith.constant 0 : i32
    %c0_i32_0 = arith.constant 0 : i32
    %c0_i32_1 = arith.constant 0 : i32
    return %c0_i32, %c0_i32_0 : i32, i32
  }
  func.func @transform_2(%arg0: i32) -> (i32, i32) {
    %c0_i32 = arith.constant 0 : i32
    %c0_i32_0 = arith.constant 0 : i32
    %c0_i32_1 = arith.constant 0 : i32
    return %c0_i32, %c0_i32_0 : i32, i32
  }
  func.func @transform_3(%arg0: i32) -> (i32, i32) {
    %c0_i32 = arith.constant 0 : i32
    %c0_i32_0 = arith.constant 0 : i32
    %c0_i32_1 = arith.constant 0 : i32
    return %c0_i32, %c0_i32_0 : i32, i32
  }
  func.func @transform_4(%arg0: i32) -> (i32, i32) {
    %c0_i32 = arith.constant 0 : i32
    %c0_i32_0 = arith.constant 0 : i32
    %c0_i32_1 = arith.constant 0 : i32
    return %c0_i32, %c0_i32_0 : i32, i32
  }
  func.func @transform_5(%arg0: i32) -> (i32, i32) {
    %c0_i32 = arith.constant 0 : i32
    %c0_i32_0 = arith.constant 0 : i32
    %c0_i32_1 = arith.constant 0 : i32
    return %c0_i32, %c0_i32_0 : i32, i32
  }
  func.func @transform_6(%arg0: i32) -> (i32, i32) {
    %c0_i32 = arith.constant 0 : i32
    %c0_i32_0 = arith.constant 0 : i32
    %c0_i32_1 = arith.constant 0 : i32
    return %c0_i32, %c0_i32_0 : i32, i32
  }
  func.func @transform_7(%arg0: i32) -> (i32, i32) {
    %c0_i32 = arith.constant 0 : i32
    %c0_i32_0 = arith.constant 0 : i32
    %c0_i32_1 = arith.constant 0 : i32
    return %c0_i32, %c0_i32_0 : i32, i32
  }
  func.func @transform_8(%arg0: i32) -> (i32, i32) {
    %c0_i32 = arith.constant 0 : i32
    %c0_i32_0 = arith.constant 0 : i32
    %c0_i32_1 = arith.constant 0 : i32
    return %c0_i32, %c0_i32_0 : i32, i32
  }
  func.func @transform_9(%arg0: i32) -> (i32, i32) {
    %c0_i32 = arith.constant 0 : i32
    %c0_i32_0 = arith.constant 0 : i32
    %c0_i32_1 = arith.constant 0 : i32
    return %c0_i32, %c0_i32_0 : i32, i32
  }
  func.func @transform_10(%arg0: i32) -> (i32, i32) {
    %c0_i32 = arith.constant 0 : i32
    %c0_i32_0 = arith.constant 0 : i32
    %c0_i32_1 = arith.constant 0 : i32
    return %c0_i32, %c0_i32_0 : i32, i32
  }
  func.func @transform_11(%arg0: i32) -> (i32, i32) {
    %c0_i32 = arith.constant 0 : i32
    %c0_i32_0 = arith.constant 0 : i32
    %c0_i32_1 = arith.constant 0 : i32
    return %c0_i32, %c0_i32_0 : i32, i32
  }
  func.func @transform_12(%arg0: i32) -> (i32, i32) {
    %c0_i32 = arith.constant 0 : i32
    %c0_i32_0 = arith.constant 0 : i32
    %c0_i32_1 = arith.constant 0 : i32
    return %c0_i32, %c0_i32_0 : i32, i32
  }
  func.func @transform_13(%arg0: i32) -> (i32, i32) {
    %c0_i32 = arith.constant 0 : i32
    %c0_i32_0 = arith.constant 0 : i32
    return %arg0, %c0_i32 : i32, i32
  }
}

</mosaic_0001>

<llo_original>
// kernel: dueling_dqn_forward.1
$region0: #{dueling_dqn_forward.1}
  #allocation0 [shape = 'u32[]', space=smem, size = 0x4, offset = 0x4, fixed_abs, tag = 'smem constant byte address 0x4 - core index']
  #allocation1 [shape = 'u32[144,128]{1,0:T(1,128)}', space=vmem, size = 0x12000, scoped, tag = 'internal scratch']
  %s0 = inlined_call_operand.vmem [shape: f32[512,128], index: 0, kind: input, shape index: {}]
  %s1 = inlined_call_operand.vmem [shape: f32[128,128], index: 1, kind: input, shape index: {}]
  %s2 = inlined_call_operand.vmem [shape: f32[1,128], index: 2, kind: input, shape index: {}]
  %s3 = inlined_call_operand.vmem [shape: f32[128,128], index: 3, kind: input, shape index: {}]
  %s4 = inlined_call_operand.vmem [shape: f32[1,128], index: 4, kind: input, shape index: {}]
  %s5 = inlined_call_operand.vmem [shape: f32[128,128], index: 5, kind: input, shape index: {}]
  %s6 = inlined_call_operand.vmem [shape: f32[1,128], index: 6, kind: input, shape index: {}]
  %s7 = inlined_call_operand.vmem [shape: f32[128,128], index: 7, kind: input, shape index: {}]
  %s8 = inlined_call_operand.vmem [shape: f32[1,128], index: 8, kind: input, shape index: {}]
  %s9 = inlined_call_operand.vmem [shape: f32[128,128], index: 9, kind: input, shape index: {}]
  %s10 = inlined_call_operand.vmem [shape: f32[1,128], index: 10, kind: input, shape index: {}]
  %s11 = inlined_call_operand.vmem [shape: f32[128,128], index: 11, kind: input, shape index: {}]
  %s12 = inlined_call_operand.vmem [shape: f32[1,128], index: 12, kind: input, shape index: {}]
  %s13 = inlined_call_operand.vmem [shape: f32[512,128], index: 13, kind: output, shape index: {}]
  %s14 = sld [smem:[#allocation0]]
  $region85: #{dueling_dqn_forward.1} parent=0
    _
  %s16 = ssub.s32 1, %s14
  %s17 = scalar_select 0, %s16, %s14
  loop: start=0, step=1, limit=4
  $region2: #{dueling_dqn_forward.1} parent=0 // loop_pre_header
    _
  $region3: #{dueling_dqn_forward.1} parent=0 // loop_header
    %s19 = sphi 0, %s23
    %p20 = scmp.ge.s32.totalorder %s19, 4
    %s29 = sphi 0, %s31
    %s32 = sphi 0, %s29
    %s33 = sphi 0, %s32
    %s49 = sphi 0, %s33
    %s53 = sphi 0, %s53
    %s55 = sphi 0, %s53
    %s56 = sphi 0, %s55
    %s70 = sphi 0, %s56
    %s74 = sphi 0, %s74
    %s76 = sphi 0, %s74
    %s77 = sphi 0, %s76
    %s91 = sphi 0, %s77
    %s95 = sphi 0, %s95
    %s97 = sphi 0, %s95
    %s98 = sphi 0, %s97
    %s112 = sphi 0, %s98
    %s116 = sphi 0, %s116
    %s118 = sphi 0, %s116
    %s119 = sphi 0, %s118
    %s133 = sphi 0, %s119
    %s137 = sphi 0, %s137
    %s139 = sphi 0, %s137
    %s140 = sphi 0, %s139
    %s154 = sphi 0, %s140
    %s158 = sphi 0, %s158
    %s160 = sphi 0, %s158
    %s161 = sphi 0, %s160
    %s175 = sphi 0, %s161
    %s179 = sphi 0, %s179
    %s181 = sphi 0, %s179
    %s182 = sphi 0, %s181
    %s196 = sphi 0, %s182
    %s200 = sphi 0, %s200
    %s202 = sphi 0, %s200
    %s203 = sphi 0, %s202
    %s217 = sphi 0, %s203
    %s221 = sphi 0, %s221
    %s223 = sphi 0, %s221
    %s224 = sphi 0, %s223
    %s238 = sphi 0, %s224
    %s242 = sphi 0, %s242
    %s244 = sphi 0, %s242
    %s245 = sphi 0, %s244
    %s259 = sphi 0, %s245
    %s263 = sphi 0, %s263
    %s265 = sphi 0, %s263
    %s266 = sphi 0, %s265
    %s280 = sphi 0, %s266
    %s284 = sphi 0, %s284
    %s286 = sphi 0, %s284
    %s287 = sphi 0, %s286
    %s301 = sphi 0, %s287
    %s307 = sphi 0, %s309
    %s310 = sphi 0, %s307
    %s311 = sphi 0, %s310
    %s327 = sphi 0, %s311
  $region4: #{dueling_dqn_forward.1} parent=0 // loop_header_branch
    %22 = sbr.rel (%p20) target = $region8
  $region5: #{dueling_dqn_forward.1} parent=0 // loop_body
    %s24 = ssub.s32 %s19, 1
    %s25 = ssub.s32 %s19, 2
    %s26 = sadd.s32 %s19, 1
    %s27 = ssub.s32 %s19, %s26
    %p28 = scmp.eq.s32.totalorder %s27, 0
    %s30 = sadd.s32 %s29, 1
    %s31 = scalar_select %p28, %s29, %s30
    %p34 = pneg %p28
    %p35 = scmp.eq.s32.totalorder %s19, 1
    %p36 = por %p34, %p35
    %p37 = scmp.ne.s32.totalorder %s29, %s32
    %p38 = scmp.eq.s32.totalorder %s19, 0
    %p39 = por %p37, %p38
    %p40 = scmp.ne.s32.totalorder %s29, %s32
    %p41 = scmp.eq.s32.totalorder %s24, 1
    %p42 = por %p40, %p41
    %p43 = scmp.ne.s32.totalorder %s32, %s33
    %p44 = scmp.eq.s32.totalorder %s24, 0
    %p45 = por %p43, %p44
    %p46 = scmp.ne.s32.totalorder %s32, %s33
    %p47 = scmp.eq.s32.totalorder %s25, 1
    %p48 = por %p46, %p47
    %p50 = scmp.ne.s32.totalorder %s33, %s49
    %p51 = scmp.eq.s32.totalorder %s25, 0
    %p52 = por %p50, %p51
    %s54 = sadd.s32 %s53, 1
    %p57 = scmp.eq.s32.totalorder %s19, 1
    %p58 = scmp.ne.s32.totalorder %s53, %s55
    %p59 = scmp.eq.s32.totalorder %s19, 0
    %p60 = por %p58, %p59
    %p61 = scmp.ne.s32.totalorder %s53, %s55
    %p62 = scmp.eq.s32.totalorder %s24, 1
    %p63 = por %p61, %p62
    %p64 = scmp.ne.s32.totalorder %s55, %s56
    %p65 = scmp.eq.s32.totalorder %s24, 0
    %p66 = por %p64, %p65
    %p67 = scmp.ne.s32.totalorder %s55, %s56
    %p68 = scmp.eq.s32.totalorder %s25, 1
    %p69 = por %p67, %p68
    %p71 = scmp.ne.s32.totalorder %s56, %s70
    %p72 = scmp.eq.s32.totalorder %s25, 0
    %p73 = por %p71, %p72
    %s75 = sadd.s32 %s74, 1
    %p78 = scmp.eq.s32.totalorder %s19, 1
    %p79 = scmp.ne.s32.totalorder %s74, %s76
    %p80 = scmp.eq.s32.totalorder %s19, 0
    %p81 = por %p79, %p80
    %p82 = scmp.ne.s32.totalorder %s74, %s76
    %p83 = scmp.eq.s32.totalorder %s24, 1
    %p84 = por %p82, %p83
    %p85 = scmp.ne.s32.totalorder %s76, %s77
    %p86 = scmp.eq.s32.totalorder %s24, 0
    %p87 = por %p85, %p86
    %p88 = scmp.ne.s32.totalorder %s76, %s77
    %p89 = scmp.eq.s32.totalorder %s25, 1
    %p90 = por %p88, %p89
    %p92 = scmp.ne.s32.totalorder %s77, %s91
    %p93 = scmp.eq.s32.totalorder %s25, 0
    %p94 = por %p92, %p93
    %s96 = sadd.s32 %s95, 1
    %p99 = scmp.eq.s32.totalorder %s19, 1
    %p100 = scmp.ne.s32.totalorder %s95, %s97
    %p101 = scmp.eq.s32.totalorder %s19, 0
    %p102 = por %p100, %p101
    %p103 = scmp.ne.s32.totalorder %s95, %s97
    %p104 = scmp.eq.s32.totalorder %s24, 1
    %p105 = por %p103, %p104
    %p106 = scmp.ne.s32.totalorder %s97, %s98
    %p107 = scmp.eq.s32.totalorder %s24, 0
    %p108 = por %p106, %p107
    %p109 = scmp.ne.s32.totalorder %s97, %s98
    %p110 = scmp.eq.s32.totalorder %s25, 1
    %p111 = por %p109, %p110
    %p113 = scmp.ne.s32.totalorder %s98, %s112
    %p114 = scmp.eq.s32.totalorder %s25, 0
    %p115 = por %p113, %p114
    %s117 = sadd.s32 %s116, 1
    %p120 = scmp.eq.s32.totalorder %s19, 1
    %p121 = scmp.ne.s32.totalorder %s116, %s118
    %p122 = scmp.eq.s32.totalorder %s19, 0
    %p123 = por %p121, %p122
    %p124 = scmp.ne.s32.totalorder %s116, %s118
    %p125 = scmp.eq.s32.totalorder %s24, 1
    %p126 = por %p124, %p125
    %p127 = scmp.ne.s32.totalorder %s118, %s119
    %p128 = scmp.eq.s32.totalorder %s24, 0
    %p129 = por %p127, %p128
    %p130 = scmp.ne.s32.totalorder %s118, %s119
    %p131 = scmp.eq.s32.totalorder %s25, 1
    %p132 = por %p130, %p131
    %p134 = scmp.ne.s32.totalorder %s119, %s133
    %p135 = scmp.eq.s32.totalorder %s25, 0
    %p136 = por %p134, %p135
    %s138 = sadd.s32 %s137, 1
    %p141 = scmp.eq.s32.totalorder %s19, 1
    %p142 = scmp.ne.s32.totalorder %s137, %s139
    %p143 = scmp.eq.s32.totalorder %s19, 0
    %p144 = por %p142, %p143
    %p145 = scmp.ne.s32.totalorder %s137, %s139
    %p146 = scmp.eq.s32.totalorder %s24, 1
    %p147 = por %p145, %p146
    %p148 = scmp.ne.s32.totalorder %s139, %s140
    %p149 = scmp.eq.s32.totalorder %s24, 0
    %p150 = por %p148, %p149
    %p151 = scmp.ne.s32.totalorder %s139, %s140
    %p152 = scmp.eq.s32.totalorder %s25, 1
    %p153 = por %p151, %p152
    %p155 = scmp.ne.s32.totalorder %s140, %s154
    %p156 = scmp.eq.s32.totalorder %s25, 0
    %p157 = por %p155, %p156
    %s159 = sadd.s32 %s158, 1
    %p162 = scmp.eq.s32.totalorder %s19, 1
    %p163 = scmp.ne.s32.totalorder %s158, %s160
    %p164 = scmp.eq.s32.totalorder %s19, 0
    %p165 = por %p163, %p164
    %p166 = scmp.ne.s32.totalorder %s158, %s160
    %p167 = scmp.eq.s32.totalorder %s24, 1
    %p168 = por %p166, %p167
    %p169 = scmp.ne.s32.totalorder %s160, %s161
    %p170 = scmp.eq.s32.totalorder %s24, 0
    %p171 = por %p169, %p170
    %p172 = scmp.ne.s32.totalorder %s160, %s161
    %p173 = scmp.eq.s32.totalorder %s25, 1
    %p174 = por %p172, %p173
    %p176 = scmp.ne.s32.totalorder %s161, %s175
    %p177 = scmp.eq.s32.totalorder %s25, 0
    %p178 = por %p176, %p177
    %s180 = sadd.s32 %s179, 1
    %p183 = scmp.eq.s32.totalorder %s19, 1
    %p184 = scmp.ne.s32.totalorder %s179, %s181
    %p185 = scmp.eq.s32.totalorder %s19, 0
    %p186 = por %p184, %p185
    %p187 = scmp.ne.s32.totalorder %s179, %s181
    %p188 = scmp.eq.s32.totalorder %s24, 1
    %p189 = por %p187, %p188
    %p190 = scmp.ne.s32.totalorder %s181, %s182
    %p191 = scmp.eq.s32.totalorder %s24, 0
    %p192 = por %p190, %p191
    %p193 = scmp.ne.s32.totalorder %s181, %s182
    %p194 = scmp.eq.s32.totalorder %s25, 1
    %p195 = por %p193, %p194
    %p197 = scmp.ne.s32.totalorder %s182, %s196
    %p198 = scmp.eq.s32.totalorder %s25, 0
    %p199 = por %p197, %p198
    %s201 = sadd.s32 %s200, 1
    %p204 = scmp.eq.s32.totalorder %s19, 1
    %p205 = scmp.ne.s32.totalorder %s200, %s202
    %p206 = scmp.eq.s32.totalorder %s19, 0
    %p207 = por %p205, %p206
    %p208 = scmp.ne.s32.totalorder %s200, %s202
    %p209 = scmp.eq.s32.totalorder %s24, 1
    %p210 = por %p208, %p209
    %p211 = scmp.ne.s32.totalorder %s202, %s203
    %p212 = scmp.eq.s32.totalorder %s24, 0
    %p213 = por %p211, %p212
    %p214 = scmp.ne.s32.totalorder %s202, %s203
    %p215 = scmp.eq.s32.totalorder %s25, 1
    %p216 = por %p214, %p215
    %p218 = scmp.ne.s32.totalorder %s203, %s217
    %p219 = scmp.eq.s32.totalorder %s25, 0
    %p220 = por %p218, %p219
    %s222 = sadd.s32 %s221, 1
    %p225 = scmp.eq.s32.totalorder %s19, 1
    %p226 = scmp.ne.s32.totalorder %s221, %s223
    %p227 = scmp.eq.s32.totalorder %s19, 0
    %p228 = por %p226, %p227
    %p229 = scmp.ne.s32.totalorder %s221, %s223
    %p230 = scmp.eq.s32.totalorder %s24, 1
    %p231 = por %p229, %p230
    %p232 = scmp.ne.s32.totalorder %s223, %s224
    %p233 = scmp.eq.s32.totalorder %s24, 0
    %p234 = por %p232, %p233
    %p235 = scmp.ne.s32.totalorder %s223, %s224
    %p236 = scmp.eq.s32.totalorder %s25, 1
    %p237 = por %p235, %p236
    %p239 = scmp.ne.s32.totalorder %s224, %s238
    %p240 = scmp.eq.s32.totalorder %s25, 0
    %p241 = por %p239, %p240
    %s243 = sadd.s32 %s242, 1
    %p246 = scmp.eq.s32.totalorder %s19, 1
    %p247 = scmp.ne.s32.totalorder %s242, %s244
    %p248 = scmp.eq.s32.totalorder %s19, 0
    %p249 = por %p247, %p248
    %p250 = scmp.ne.s32.totalorder %s242, %s244
    %p251 = scmp.eq.s32.totalorder %s24, 1
    %p252 = por %p250, %p251
    %p253 = scmp.ne.s32.totalorder %s244, %s245
    %p254 = scmp.eq.s32.totalorder %s24, 0
    %p255 = por %p253, %p254
    %p256 = scmp.ne.s32.totalorder %s244, %s245
    %p257 = scmp.eq.s32.totalorder %s25, 1
    %p258 = por %p256, %p257
    %p260 = scmp.ne.s32.totalorder %s245, %s259
    %p261 = scmp.eq.s32.totalorder %s25, 0
    %p262 = por %p260, %p261
    %s264 = sadd.s32 %s263, 1
    %p267 = scmp.eq.s32.totalorder %s19, 1
    %p268 = scmp.ne.s32.totalorder %s263, %s265
    %p269 = scmp.eq.s32.totalorder %s19, 0
    %p270 = por %p268, %p269
    %p271 = scmp.ne.s32.totalorder %s263, %s265
    %p272 = scmp.eq.s32.totalorder %s24, 1
    %p273 = por %p271, %p272
    %p274 = scmp.ne.s32.totalorder %s265, %s266
    %p275 = scmp.eq.s32.totalorder %s24, 0
    %p276 = por %p274, %p275
    %p277 = scmp.ne.s32.totalorder %s265, %s266
    %p278 = scmp.eq.s32.totalorder %s25, 1
    %p279 = por %p277, %p278
    %p281 = scmp.ne.s32.totalorder %s266, %s280
    %p282 = scmp.eq.s32.totalorder %s25, 0
    %p283 = por %p281, %p282
    %s285 = sadd.s32 %s284, 1
    %p288 = scmp.eq.s32.totalorder %s19, 1
    %p289 = scmp.ne.s32.totalorder %s284, %s286
    %p290 = scmp.eq.s32.totalorder %s19, 0
    %p291 = por %p289, %p290
    %p292 = scmp.ne.s32.totalorder %s284, %s286
    %p293 = scmp.eq.s32.totalorder %s24, 1
    %p294 = por %p292, %p293
    %p295 = scmp.ne.s32.totalorder %s286, %s287
    %p296 = scmp.eq.s32.totalorder %s24, 0
    %p297 = por %p295, %p296
    %p298 = scmp.ne.s32.totalorder %s286, %s287
    %p299 = scmp.eq.s32.totalorder %s25, 1
    %p300 = por %p298, %p299
    %p302 = scmp.ne.s32.totalorder %s287, %s301
    %p303 = scmp.eq.s32.totalorder %s25, 0
    %p304 = por %p302, %p303
    %s305 = ssub.s32 %s19, %s26
    %p306 = scmp.eq.s32.totalorder %s305, 0
    %s308 = sadd.s32 %s307, 1
    %s309 = scalar_select %p306, %s307, %s308
    %p312 = pneg %p306
    %p313 = scmp.eq.s32.totalorder %s19, 1
    %p314 = por %p312, %p313
    %p315 = scmp.ne.s32.totalorder %s307, %s310
    %p316 = scmp.eq.s32.totalorder %s19, 0
    %p317 = por %p315, %p316
    %p318 = scmp.ne.s32.totalorder %s307, %s310
    %p319 = scmp.eq.s32.totalorder %s24, 1
    %p320 = por %p318, %p319
    %p321 = scmp.ne.s32.totalorder %s310, %s311
    %p322 = scmp.eq.s32.totalorder %s24, 0
    %p323 = por %p321, %p322
    %p324 = scmp.ne.s32.totalorder %s310, %s311
    %p325 = scmp.eq.s32.totalorder %s25, 1
    %p326 = por %p324, %p325
    %p328 = scmp.ne.s32.totalorder %s311, %s327
    %p329 = scmp.eq.s32.totalorder %s25, 0
    %p330 = por %p328, %p329
    %p331 = scmp.le.s32.totalorder 1, %s19
    %p332 = scmp.lt.s32.totalorder %s19, 3
    %p333 = pnand %p331, %p332
    %p334 = pneg %p333
    // Predicated region
    $region9: #{dueling_dqn_forward.1} parent=5 // pred_check
      _
    $region10: #{dueling_dqn_forward.1} parent=5 // pred_check_branch
      %336 = sbr.rel (%p333) target = $region12
    $region11: #{dueling_dqn_forward.1} parent=5 // pred_region
      %s337 = ssub.s32 %s19, 1
      // Predicated region
      $region13: #{dueling_dqn_forward.1} parent=11 // pred_check
        %p338 = pneg %p66
      $region14: #{dueling_dqn_forward.1} parent=11 // pred_check_branch
        %340 = sbr.rel (%p338) target = $region16
      $region15: #{dueling_dqn_forward.1} parent=11 // pred_region
        _
      $region16: #{dueling_dqn_forward.1} parent=11 // pred_fallthru
        _
      // Predicated region
      $region17: #{dueling_dqn_forward.1} parent=11 // pred_check
        %p341 = pneg %p87
      $region18: #{dueling_dqn_forward.1} parent=11 // pred_check_branch
        %343 = sbr.rel (%p341) target = $region20
      $region19: #{dueling_dqn_forward.1} parent=11 // pred_region
        _
      $region20: #{dueling_dqn_forward.1} parent=11 // pred_fallthru
        _
      // Predicated region
      $region21: #{dueling_dqn_forward.1} parent=11 // pred_check
        %p344 = pneg %p108
      $region22: #{dueling_dqn_forward.1} parent=11 // pred_check_branch
        %346 = sbr.rel (%p344) target = $region24
      $region23: #{dueling_dqn_forward.1} parent=11 // pred_region
        _
      $region24: #{dueling_dqn_forward.1} parent=11 // pred_fallthru
        _
      // Predicated region
      $region25: #{dueling_dqn_forward.1} parent=11 // pred_check
        %p347 = pneg %p129
      $region26: #{dueling_dqn_forward.1} parent=11 // pred_check_branch
        %349 = sbr.rel (%p347) target = $region28
      $region27: #{dueling_dqn_forward.1} parent=11 // pred_region
        _
      $region28: #{dueling_dqn_forward.1} parent=11 // pred_fallthru
        _
      // Predicated region
      $region29: #{dueling_dqn_forward.1} parent=11 // pred_check
        %p350 = pneg %p150
      $region30: #{dueling_dqn_forward.1} parent=11 // pred_check_branch
        %352 = sbr.rel (%p350) target = $region32
      $region31: #{dueling_dqn_forward.1} parent=11 // pred_region
        _
      $region32: #{dueling_dqn_forward.1} parent=11 // pred_fallthru
        _
      // Predicated region
      $region33: #{dueling_dqn_forward.1} parent=11 // pred_check
        %p353 = pneg %p171
      $region34: #{dueling_dqn_forward.1} parent=11 // pred_check_branch
        %355 = sbr.rel (%p353) target = $region36
      $region35: #{dueling_dqn_forward.1} parent=11 // pred_region
        _
      $region36: #{dueling_dqn_forward.1} parent=11 // pred_fallthru
        _
      // Predicated region
      $region37: #{dueling_dqn_forward.1} parent=11 // pred_check
        %p356 = pneg %p192
      $region38: #{dueling_dqn_forward.1} parent=11 // pred_check_branch
        %358 = sbr.rel (%p356) target = $region40
      $region39: #{dueling_dqn_forward.1} parent=11 // pred_region
        _
      $region40: #{dueling_dqn_forward.1} parent=11 // pred_fallthru
        _
      // Predicated region
      $region41: #{dueling_dqn_forward.1} parent=11 // pred_check
        %p359 = pneg %p213
      $region42: #{dueling_dqn_forward.1} parent=11 // pred_check_branch
        %361 = sbr.rel (%p359) target = $region44
      $region43: #{dueling_dqn_forward.1} parent=11 // pred_region
        _
      $region44: #{dueling_dqn_forward.1} parent=11 // pred_fallthru
        _
      // Predicated region
      $region45: #{dueling_dqn_forward.1} parent=11 // pred_check
        %p362 = pneg %p234
      $region46: #{dueling_dqn_forward.1} parent=11 // pred_check_branch
        %364 = sbr.rel (%p362) target = $region48
      $region47: #{dueling_dqn_forward.1} parent=11 // pred_region
        _
      $region48: #{dueling_dqn_forward.1} parent=11 // pred_fallthru
        _
      // Predicated region
      $region49: #{dueling_dqn_forward.1} parent=11 // pred_check
        %p365 = pneg %p255
      $region50: #{dueling_dqn_forward.1} parent=11 // pred_check_branch
        %367 = sbr.rel (%p365) target = $region52
      $region51: #{dueling_dqn_forward.1} parent=11 // pred_region
        _
      $region52: #{dueling_dqn_forward.1} parent=11 // pred_fallthru
        _
      // Predicated region
      $region53: #{dueling_dqn_forward.1} parent=11 // pred_check
        %p368 = pneg %p276
      $region54: #{dueling_dqn_forward.1} parent=11 // pred_check_branch
        %370 = sbr.rel (%p368) target = $region56
      $region55: #{dueling_dqn_forward.1} parent=11 // pred_region
        _
      $region56: #{dueling_dqn_forward.1} parent=11 // pred_fallthru
        _
      // Predicated region
      $region57: #{dueling_dqn_forward.1} parent=11 // pred_check
        %p371 = pneg %p297
      $region58: #{dueling_dqn_forward.1} parent=11 // pred_check_branch
        %373 = sbr.rel (%p371) target = $region60
      $region59: #{dueling_dqn_forward.1} parent=11 // pred_region
        _
      $region60: #{dueling_dqn_forward.1} parent=11 // pred_fallthru
        _
    $region12: #{dueling_dqn_forward.1} parent=5 // pred_fallthru
      _
    %p374 = scmp.lt.s32.totalorder %s19, 2
    // Predicated region
    $region61: #{dueling_dqn_forward.1} parent=5 // pred_check
      %p375 = pneg %p374
    $region62: #{dueling_dqn_forward.1} parent=5 // pred_check_branch
      %377 = sbr.rel (%p375) target = $region64
    $region63: #{dueling_dqn_forward.1} parent=5 // pred_region
      // Predicated region
      $region65: #{dueling_dqn_forward.1} parent=63 // pred_check
        %p378 = pneg %p39
      $region66: #{dueling_dqn_forward.1} parent=63 // pred_check_branch
        %380 = sbr.rel (%p378) target = $region68
      $region67: #{dueling_dqn_forward.1} parent=63 // pred_region
        %s381 = smul.u32 32, %s19
        %p382 = scmp.lt.s32.totalorder %s381, 63
        %s383 = scalar_select %p382, %s381, 63
        %s384 = smul.addr %s383, 8
        %s385 = scalar_lea.vmem %s0, %s384
        %s386 = smul.u32 32, %s19
      $region68: #{dueling_dqn_forward.1} parent=63 // pred_fallthru
        _
    $region64: #{dueling_dqn_forward.1} parent=5 // pred_fallthru
      _
    %p387 = scmp.le.s32.totalorder 1, %s19
    %p388 = scmp.lt.s32.totalorder %s19, 3
    %p389 = pnand %p387, %p388
    %p390 = pneg %p389
    // Predicated region
    $region69: #{dueling_dqn_forward.1} parent=5 // pred_check
      _
    $region70: #{dueling_dqn_forward.1} parent=5 // pred_check_branch
      %392 = sbr.rel (%p389) target = $region72
    $region71: #{dueling_dqn_forward.1} parent=5 // pred_region
      %s393 = ssub.s32 %s19, 1
      %s394 = smul.u32 32, %s24
      %p395 = scmp.lt.s32.totalorder %s394, 63
      %s396 = scalar_select %p395, %s394, 63
      %s397 = smul.addr %s396, 8
      %s398 = scalar_lea.vmem %s0, %s397
      %p399 = pneg %p45
      %p400 = pneg %p42
      %p401 = pneg %p66
      %p402 = pneg %p63
      %p403 = pneg %p87
      %p404 = pneg %p84
      %p405 = pneg %p108
      %p406 = pneg %p105
      %p407 = pneg %p129
      %p408 = pneg %p126
      %p409 = pneg %p150
      %p410 = pneg %p147
      %p411 = pneg %p171
      %p412 = pneg %p168
      %p413 = pneg %p192
      %p414 = pneg %p189
      %p415 = pneg %p213
      %p416 = pneg %p210
      %p417 = pneg %p234
      %p418 = pneg %p231
      %p419 = pneg %p255
      %p420 = pneg %p252
      %p421 = pneg %p276
      %p422 = pneg %p273
      %p423 = pneg %p297
      %p424 = pneg %p294
      %p425 = pneg %p323
      %p426 = pneg %p320
      %s427 = smul.u32 32, %s24
      %p428 = scmp.lt.s32.totalorder %s427, 63
      %s429 = scalar_select %p428, %s427, 63
      %s430 = smul.addr %s429, 8
      %s431 = scalar_lea.vmem %s13, %s430
      %s432 = smul.u32 32, %s24
      %p433 = scmp.lt.s32.totalorder %s432, 63
      %s434 = scalar_select %p433, %s432, 63
      %s435 = smul.addr %s434, 8
      %s436 = scalar_lea.vmem %s0, %s435
      %s437 = smul.u32 32, %s24
      %s438 = smul.u32 32, %s24
      %p439 = scmp.lt.s32.totalorder %s438, 63
      %s440 = scalar_select %p439, %s438, 63
      %s441 = smul.addr %s440, 8
      %s442 = scalar_lea.vmem %s13, %s441
      %s443 = smul.u32 32, %s24
      %v444 = vld [vmem:[%s436] sm:$0xff]
      %v445 = vld [vmem:[%s436 + $0x8] sm:$0xff]
      %v446 = vld [vmem:[%s436 + $0x10] sm:$0xff]
      %v447 = vld [vmem:[%s436 + $0x18] sm:$0xff]
      %v448 = vld [vmem:[%s436 + $0x20] sm:$0xff]
      %v449 = vld [vmem:[%s436 + $0x28] sm:$0xff]
      %v450 = vld [vmem:[%s436 + $0x30] sm:$0xff]
      %v451 = vld [vmem:[%s436 + $0x38] sm:$0xff]
      %v452 = vld [vmem:[%s436 + $0x40] sm:$0xff]
      %v453 = vld [vmem:[%s436 + $0x48] sm:$0xff]
      %v454 = vld [vmem:[%s436 + $0x50] sm:$0xff]
      %v455 = vld [vmem:[%s436 + $0x58] sm:$0xff]
      %v456 = vld [vmem:[%s436 + $0x60] sm:$0xff]
      %v457 = vld [vmem:[%s436 + $0x68] sm:$0xff]
      %v458 = vld [vmem:[%s436 + $0x70] sm:$0xff]
      %v459 = vld [vmem:[%s436 + $0x78] sm:$0xff]
      %v460 = vld [vmem:[%s436 + $0x80] sm:$0xff]
      %v461 = vld [vmem:[%s436 + $0x88] sm:$0xff]
      %v462 = vld [vmem:[%s436 + $0x90] sm:$0xff]
      %v463 = vld [vmem:[%s436 + $0x98] sm:$0xff]
      %v464 = vld [vmem:[%s436 + $0xa0] sm:$0xff]
      %v465 = vld [vmem:[%s436 + $0xa8] sm:$0xff]
      %v466 = vld [vmem:[%s436 + $0xb0] sm:$0xff]
      %v467 = vld [vmem:[%s436 + $0xb8] sm:$0xff]
      %v468 = vld [vmem:[%s436 + $0xc0] sm:$0xff]
      %v469 = vld [vmem:[%s436 + $0xc8] sm:$0xff]
      %v470 = vld [vmem:[%s436 + $0xd0] sm:$0xff]
      %v471 = vld [vmem:[%s436 + $0xd8] sm:$0xff]
      %v472 = vld [vmem:[%s436 + $0xe0] sm:$0xff]
      %v473 = vld [vmem:[%s436 + $0xe8] sm:$0xff]
      %v474 = vld [vmem:[%s436 + $0xf0] sm:$0xff]
      %v475 = vld [vmem:[%s436 + $0xf8] sm:$0xff]
      %v476 = vld [vmem:[%s1] sm:$0xff]
      %v477 = vld [vmem:[%s1 + $0x8] sm:$0xff]
      %v478 = vld [vmem:[%s1 + $0x10] sm:$0xff]
      %v479 = vld [vmem:[%s1 + $0x18] sm:$0xff]
      %v480 = vld [vmem:[%s1 + $0x20] sm:$0xff]
      %v481 = vld [vmem:[%s1 + $0x28] sm:$0xff]
      %v482 = vld [vmem:[%s1 + $0x30] sm:$0xff]
      %v483 = vld [vmem:[%s1 + $0x38] sm:$0xff]
      %v484 = vld [vmem:[%s1 + $0x40] sm:$0xff]
      %v485 = vld [vmem:[%s1 + $0x48] sm:$0xff]
      %v486 = vld [vmem:[%s1 + $0x50] sm:$0xff]
      %v487 = vld [vmem:[%s1 + $0x58] sm:$0xff]
      %v488 = vld [vmem:[%s1 + $0x60] sm:$0xff]
      %v489 = vld [vmem:[%s1 + $0x68] sm:$0xff]
      %v490 = vld [vmem:[%s1 + $0x70] sm:$0xff]
      %v491 = vld [vmem:[%s1 + $0x78] sm:$0xff]
      %v492 = vld [vmem:[%s2] sm:$0x1]
      %v494 = vlaneseq
      %v495 = vshrl.u32 %v494, 7
      %v496 = vsub.s32 0, %v495
      %v497 = vrot.slane %v492, %v496
      %499 = vmatprep.subr.mxu0 0.0
      %500 = vmatpush1.msra.mxu0 %v491
      %501 = vmatprep.subr.mxu0 0.0
      %502 = vmatpush1.msra.mxu0 %v490
      %503 = vmatprep.subr.mxu0 0.0
      %504 = vmatpush1.msra.mxu0 %v489
      %505 = vmatprep.subr.mxu0 0.0
      %506 = vmatpush1.msra.mxu0 %v488
      %507 = vmatprep.subr.mxu0 0.0
      %508 = vmatpush1.msra.mxu0 %v487
      %509 = vmatprep.subr.mxu0 0.0
      %510 = vmatpush1.msra.mxu0 %v486
      %511 = vmatprep.subr.mxu0 0.0
      %512 = vmatpush1.msra.mxu0 %v485
      %513 = vmatprep.subr.mxu0 0.0
      %514 = vmatpush1.msra.mxu0 %v484
      %515 = vmatprep.subr.mxu0 0.0
      %516 = vmatpush1.msra.mxu0 %v483
      %517 = vmatprep.subr.mxu0 0.0
      %518 = vmatpush1.msra.mxu0 %v482
      %519 = vmatprep.subr.mxu0 0.0
      %520 = vmatpush1.msra.mxu0 %v481
      %521 = vmatprep.subr.mxu0 0.0
      %522 = vmatpush1.msra.mxu0 %v480
      %523 = vmatprep.subr.mxu0 0.0
      %524 = vmatpush1.msra.mxu0 %v479
      %525 = vmatprep.subr.mxu0 0.0
      %526 = vmatpush1.msra.mxu0 %v478
      %527 = vmatprep.subr.mxu0 0.0
      %528 = vmatpush1.msra.mxu0 %v477
      %529 = vmatprep.subr.mxu0 0.0
      %530 = vmatpush1.msra.mxu0 %v476
      %531 = vmatprep.subr.mxu0 0.0
      %532 = vmatpush2.msra.mxu0 0.0
      %533 = vmatprep.subr.mxu0 0.0
      %534 = vmatpush2.msra.mxu0 0.0
      %535 = vmatprep.subr.mxu0 0.0
      %536 = vmatpush2.msra.mxu0 0.0
      %537 = vmatprep.subr.mxu0 0.0
      %538 = vmatpush2.msra.mxu0 0.0
      %539 = vmatprep.subr.mxu0 0.0
      %540 = vmatpush2.msra.mxu0 0.0
      %541 = vmatprep.subr.mxu0 0.0
      %542 = vmatpush2.msra.mxu0 0.0
      %543 = vmatprep.subr.mxu0 0.0
      %544 = vmatpush2.msra.mxu0 0.0
      %545 = vmatprep.subr.mxu0 0.0
      %546 = vmatpush2.msra.mxu0 0.0
      %547 = vmatprep.subr.mxu0 0.0
      %548 = vmatpush2.msra.mxu0 0.0
      %549 = vmatprep.subr.mxu0 0.0
      %550 = vmatpush2.msra.mxu0 0.0
      %551 = vmatprep.subr.mxu0 0.0
      %552 = vmatpush2.msra.mxu0 0.0
      %553 = vmatprep.subr.mxu0 0.0
      %554 = vmatpush2.msra.mxu0 0.0
      %555 = vmatprep.subr.mxu0 0.0
      %556 = vmatpush2.msra.mxu0 0.0
      %557 = vmatprep.subr.mxu0 0.0
      %558 = vmatpush2.msra.mxu0 0.0
      %559 = vmatprep.subr.mxu0 0.0
      %560 = vmatpush2.msra.mxu0 0.0
      %561 = vmatprep.subr.mxu0 0.0
      %562 = vmatpush2.msra.mxu0 0.0
      %563 = vmatprep.mubr.f32.mxu0 0.0
      %564 = vmatmul.mubr.f32.gmra.mxu0 %v444
      %v565 = vpop.f32.mrf.mxu0
      %v566 = vadd.f32 %v497, %v565
      %v567 = vpop.f32.mrf.mxu0
      %568 = vmatprep.mubr.f32.mxu0 0.0
      %569 = vmatmul.mubr.f32.gmra.mxu0 %v445
      %v570 = vpop.f32.mrf.mxu0
      %v571 = vadd.f32 %v497, %v570
      %v572 = vpop.f32.mrf.mxu0
      %573 = vmatprep.mubr.f32.mxu0 0.0
      %574 = vmatmul.mubr.f32.gmra.mxu0 %v446
      %v575 = vpop.f32.mrf.mxu0
      %v576 = vadd.f32 %v497, %v575
      %v577 = vpop.f32.mrf.mxu0
      %578 = vmatprep.mubr.f32.mxu0 0.0
      %579 = vmatmul.mubr.f32.gmra.mxu0 %v447
      %v580 = vpop.f32.mrf.mxu0
      %v581 = vadd.f32 %v497, %v580
      %v582 = vpop.f32.mrf.mxu0
      %583 = vmatprep.mubr.f32.mxu0 0.0
      %584 = vmatmul.mubr.f32.gmra.mxu0 %v448
      %v585 = vpop.f32.mrf.mxu0
      %v586 = vadd.f32 %v497, %v585
      %v587 = vpop.f32.mrf.mxu0
      %588 = vmatprep.mubr.f32.mxu0 0.0
      %589 = vmatmul.mubr.f32.gmra.mxu0 %v449
      %v590 = vpop.f32.mrf.mxu0
      %v591 = vadd.f32 %v497, %v590
      %v592 = vpop.f32.mrf.mxu0
      %593 = vmatprep.mubr.f32.mxu0 0.0
      %594 = vmatmul.mubr.f32.gmra.mxu0 %v450
      %v595 = vpop.f32.mrf.mxu0
      %v596 = vadd.f32 %v497, %v595
      %v597 = vpop.f32.mrf.mxu0
      %598 = vmatprep.mubr.f32.mxu0 0.0
      %599 = vmatmul.mubr.f32.gmra.mxu0 %v451
      %v600 = vpop.f32.mrf.mxu0
      %v601 = vadd.f32 %v497, %v600
      %v602 = vpop.f32.mrf.mxu0
      %603 = vmatprep.mubr.f32.mxu0 0.0
      %604 = vmatmul.mubr.f32.gmra.mxu0 %v452
      %v605 = vpop.f32.mrf.mxu0
      %v606 = vadd.f32 %v497, %v605
      %v607 = vpop.f32.mrf.mxu0
      %608 = vmatprep.mubr.f32.mxu0 0.0
      %609 = vmatmul.mubr.f32.gmra.mxu0 %v453
      %v610 = vpop.f32.mrf.mxu0
      %v611 = vadd.f32 %v497, %v610
      %v612 = vpop.f32.mrf.mxu0
      %613 = vmatprep.mubr.f32.mxu0 0.0
      %614 = vmatmul.mubr.f32.gmra.mxu0 %v454
      %v615 = vpop.f32.mrf.mxu0
      %v616 = vadd.f32 %v497, %v615
      %v617 = vpop.f32.mrf.mxu0
      %618 = vmatprep.mubr.f32.mxu0 0.0
      %619 = vmatmul.mubr.f32.gmra.mxu0 %v455
      %v620 = vpop.f32.mrf.mxu0
      %v621 = vadd.f32 %v497, %v620
      %v622 = vpop.f32.mrf.mxu0
      %623 = vmatprep.mubr.f32.mxu0 0.0
      %624 = vmatmul.mubr.f32.gmra.mxu0 %v456
      %v625 = vpop.f32.mrf.mxu0
      %v626 = vadd.f32 %v497, %v625
      %v627 = vpop.f32.mrf.mxu0
      %628 = vmatprep.mubr.f32.mxu0 0.0
      %629 = vmatmul.mubr.f32.gmra.mxu0 %v457
      %v630 = vpop.f32.mrf.mxu0
      %v631 = vadd.f32 %v497, %v630
      %v632 = vpop.f32.mrf.mxu0
      %633 = vmatprep.mubr.f32.mxu0 0.0
      %634 = vmatmul.mubr.f32.gmra.mxu0 %v458
      %v635 = vpop.f32.mrf.mxu0
      %v636 = vadd.f32 %v497, %v635
      %v637 = vpop.f32.mrf.mxu0
      %638 = vmatprep.mubr.f32.mxu0 0.0
      %639 = vmatmul.mubr.f32.gmra.mxu0 %v459
      %v640 = vpop.f32.mrf.mxu0
      %v641 = vadd.f32 %v497, %v640
      %v642 = vpop.f32.mrf.mxu0
      %643 = vmatprep.mubr.f32.mxu0 0.0
      %644 = vmatmul.mubr.f32.gmra.mxu0 %v460
      %v645 = vpop.f32.mrf.mxu0
      %v646 = vadd.f32 %v497, %v645
      %v647 = vpop.f32.mrf.mxu0
      %648 = vmatprep.mubr.f32.mxu0 0.0
      %649 = vmatmul.mubr.f32.gmra.mxu0 %v461
      %v650 = vpop.f32.mrf.mxu0
      %v651 = vadd.f32 %v497, %v650
      %v652 = vpop.f32.mrf.mxu0
      %653 = vmatprep.mubr.f32.mxu0 0.0
      %654 = vmatmul.mubr.f32.gmra.mxu0 %v462
      %v655 = vpop.f32.mrf.mxu0
      %v656 = vadd.f32 %v497, %v655
      %v657 = vpop.f32.mrf.mxu0
      %658 = vmatprep.mubr.f32.mxu0 0.0
      %659 = vmatmul.mubr.f32.gmra.mxu0 %v463
      %v660 = vpop.f32.mrf.mxu0
      %v661 = vadd.f32 %v497, %v660
      %v662 = vpop.f32.mrf.mxu0
      %663 = vmatprep.mubr.f32.mxu0 0.0
      %664 = vmatmul.mubr.f32.gmra.mxu0 %v464
      %v665 = vpop.f32.mrf.mxu0
      %v666 = vadd.f32 %v497, %v665
      %v667 = vpop.f32.mrf.mxu0
      %668 = vmatprep.mubr.f32.mxu0 0.0
      %669 = vmatmul.mubr.f32.gmra.mxu0 %v465
      %v670 = vpop.f32.mrf.mxu0
      %v671 = vadd.f32 %v497, %v670
      %v672 = vpop.f32.mrf.mxu0
      %673 = vmatprep.mubr.f32.mxu0 0.0
      %674 = vmatmul.mubr.f32.gmra.mxu0 %v466
      %v675 = vpop.f32.mrf.mxu0
      %v676 = vadd.f32 %v497, %v675
      %v677 = vpop.f32.mrf.mxu0
      %678 = vmatprep.mubr.f32.mxu0 0.0
      %679 = vmatmul.mubr.f32.gmra.mxu0 %v467
      %v680 = vpop.f32.mrf.mxu0
      %v681 = vadd.f32 %v497, %v680
      %v682 = vpop.f32.mrf.mxu0
      %683 = vmatprep.mubr.f32.mxu0 0.0
      %684 = vmatmul.mubr.f32.gmra.mxu0 %v468
      %v685 = vpop.f32.mrf.mxu0
      %v686 = vadd.f32 %v497, %v685
      %v687 = vpop.f32.mrf.mxu0
      %688 = vmatprep.mubr.f32.mxu0 0.0
      %689 = vmatmul.mubr.f32.gmra.mxu0 %v469
      %v690 = vpop.f32.mrf.mxu0
      %v691 = vadd.f32 %v497, %v690
      %v692 = vpop.f32.mrf.mxu0
      %693 = vmatprep.mubr.f32.mxu0 0.0
      %694 = vmatmul.mubr.f32.gmra.mxu0 %v470
      %v695 = vpop.f32.mrf.mxu0
      %v696 = vadd.f32 %v497, %v695
      %v697 = vpop.f32.mrf.mxu0
      %698 = vmatprep.mubr.f32.mxu0 0.0
      %699 = vmatmul.mubr.f32.gmra.mxu0 %v471
      %v700 = vpop.f32.mrf.mxu0
      %v701 = vadd.f32 %v497, %v700
      %v702 = vpop.f32.mrf.mxu0
      %703 = vmatprep.mubr.f32.mxu0 0.0
      %704 = vmatmul.mubr.f32.gmra.mxu0 %v472
      %v705 = vpop.f32.mrf.mxu0
      %v706 = vadd.f32 %v497, %v705
      %v707 = vpop.f32.mrf.mxu0
      %708 = vmatprep.mubr.f32.mxu0 0.0
      %709 = vmatmul.mubr.f32.gmra.mxu0 %v473
      %v710 = vpop.f32.mrf.mxu0
      %v711 = vadd.f32 %v497, %v710
      %v712 = vpop.f32.mrf.mxu0
      %713 = vmatprep.mubr.f32.mxu0 0.0
      %714 = vmatmul.mubr.f32.gmra.mxu0 %v474
      %v715 = vpop.f32.mrf.mxu0
      %v716 = vadd.f32 %v497, %v715
      %v717 = vpop.f32.mrf.mxu0
      %718 = vmatprep.mubr.f32.mxu0 0.0
      %719 = vmatmul.mubr.f32.gmra.mxu0 %v475
      %v720 = vpop.f32.mrf.mxu0
      %v721 = vadd.f32 %v497, %v720
      %v722 = vpop.f32.mrf.mxu0
      %723 = vdwg.mxu0
      %vm724 = vcmp.gt.f32.partialorder %v566, 0.0
      %vm725 = vcmp.gt.f32.partialorder %v571, 0.0
      %vm726 = vcmp.gt.f32.partialorder %v576, 0.0
      %vm727 = vcmp.gt.f32.partialorder %v581, 0.0
      %vm728 = vcmp.gt.f32.partialorder %v586, 0.0
      %vm729 = vcmp.gt.f32.partialorder %v591, 0.0
      %vm730 = vcmp.gt.f32.partialorder %v596, 0.0
      %vm731 = vcmp.gt.f32.partialorder %v601, 0.0
      %vm732 = vcmp.gt.f32.partialorder %v606, 0.0
      %vm733 = vcmp.gt.f32.partialorder %v611, 0.0
      %vm734 = vcmp.gt.f32.partialorder %v616, 0.0
      %vm735 = vcmp.gt.f32.partialorder %v621, 0.0
      %vm736 = vcmp.gt.f32.partialorder %v626, 0.0
      %vm737 = vcmp.gt.f32.partialorder %v631, 0.0
      %vm738 = vcmp.gt.f32.partialorder %v636, 0.0
      %vm739 = vcmp.gt.f32.partialorder %v641, 0.0
      %vm740 = vcmp.gt.f32.partialorder %v646, 0.0
      %vm741 = vcmp.gt.f32.partialorder %v651, 0.0
      %vm742 = vcmp.gt.f32.partialorder %v656, 0.0
      %vm743 = vcmp.gt.f32.partialorder %v661, 0.0
      %vm744 = vcmp.gt.f32.partialorder %v666, 0.0
      %vm745 = vcmp.gt.f32.partialorder %v671, 0.0
      %vm746 = vcmp.gt.f32.partialorder %v676, 0.0
      %vm747 = vcmp.gt.f32.partialorder %v681, 0.0
      %vm748 = vcmp.gt.f32.partialorder %v686, 0.0
      %vm749 = vcmp.gt.f32.partialorder %v691, 0.0
      %vm750 = vcmp.gt.f32.partialorder %v696, 0.0
      %vm751 = vcmp.gt.f32.partialorder %v701, 0.0
      %vm752 = vcmp.gt.f32.partialorder %v706, 0.0
      %vm753 = vcmp.gt.f32.partialorder %v711, 0.0
      %vm754 = vcmp.gt.f32.partialorder %v716, 0.0
      %vm755 = vcmp.gt.f32.partialorder %v721, 0.0
      %v756 = vmul.f32 %v566, 0.01
      %v757 = vmul.f32 %v571, 0.01
      %v758 = vmul.f32 %v576, 0.01
      %v759 = vmul.f32 %v581, 0.01
      %v760 = vmul.f32 %v586, 0.01
      %v761 = vmul.f32 %v591, 0.01
      %v762 = vmul.f32 %v596, 0.01
      %v763 = vmul.f32 %v601, 0.01
      %v764 = vmul.f32 %v606, 0.01
      %v765 = vmul.f32 %v611, 0.01
      %v766 = vmul.f32 %v616, 0.01
      %v767 = vmul.f32 %v621, 0.01
      %v768 = vmul.f32 %v626, 0.01
      %v769 = vmul.f32 %v631, 0.01
      %v770 = vmul.f32 %v636, 0.01
      %v771 = vmul.f32 %v641, 0.01
      %v772 = vmul.f32 %v646, 0.01
      %v773 = vmul.f32 %v651, 0.01
      %v774 = vmul.f32 %v656, 0.01
      %v775 = vmul.f32 %v661, 0.01
      %v776 = vmul.f32 %v666, 0.01
      %v777 = vmul.f32 %v671, 0.01
      %v778 = vmul.f32 %v676, 0.01
      %v779 = vmul.f32 %v681, 0.01
      %v780 = vmul.f32 %v686, 0.01
      %v781 = vmul.f32 %v691, 0.01
      %v782 = vmul.f32 %v696, 0.01
      %v783 = vmul.f32 %v701, 0.01
      %v784 = vmul.f32 %v706, 0.01
      %v785 = vmul.f32 %v711, 0.01
      %v786 = vmul.f32 %v716, 0.01
      %v787 = vmul.f32 %v721, 0.01
      %v788 = vsel %vm724, %v566, %v756
      %v789 = vsel %vm725, %v571, %v757
      %v790 = vsel %vm726, %v576, %v758
      %v791 = vsel %vm727, %v581, %v759
      %v792 = vsel %vm728, %v586, %v760
      %v793 = vsel %vm729, %v591, %v761
      %v794 = vsel %vm730, %v596, %v762
      %v795 = vsel %vm731, %v601, %v763
      %v796 = vsel %vm732, %v606, %v764
      %v797 = vsel %vm733, %v611, %v765
      %v798 = vsel %vm734, %v616, %v766
      %v799 = vsel %vm735, %v621, %v767
      %v800 = vsel %vm736, %v626, %v768
      %v801 = vsel %vm737, %v631, %v769
      %v802 = vsel %vm738, %v636, %v770
      %v803 = vsel %vm739, %v641, %v771
      %v804 = vsel %vm740, %v646, %v772
      %v805 = vsel %vm741, %v651, %v773
      %v806 = vsel %vm742, %v656, %v774
      %v807 = vsel %vm743, %v661, %v775
      %v808 = vsel %vm744, %v666, %v776
      %v809 = vsel %vm745, %v671, %v777
      %v810 = vsel %vm746, %v676, %v778
      %v811 = vsel %vm747, %v681, %v779
      %v812 = vsel %vm748, %v686, %v780
      %v813 = vsel %vm749, %v691, %v781
      %v814 = vsel %vm750, %v696, %v782
      %v815 = vsel %vm751, %v701, %v783
      %v816 = vsel %vm752, %v706, %v784
      %v817 = vsel %vm753, %v711, %v785
      %v818 = vsel %vm754, %v716, %v786
      %v819 = vsel %vm755, %v721, %v787
      %v820 = vld [vmem:[%s3] sm:$0xff]
      %v821 = vld [vmem:[%s3 + $0x8] sm:$0xff]
      %v822 = vld [vmem:[%s3 + $0x10] sm:$0xff]
      %v823 = vld [vmem:[%s3 + $0x18] sm:$0xff]
      %v824 = vld [vmem:[%s3 + $0x20] sm:$0xff]
      %v825 = vld [vmem:[%s3 + $0x28] sm:$0xff]
      %v826 = vld [vmem:[%s3 + $0x30] sm:$0xff]
      %v827 = vld [vmem:[%s3 + $0x38] sm:$0xff]
      %v828 = vld [vmem:[%s3 + $0x40] sm:$0xff]
      %v829 = vld [vmem:[%s3 + $0x48] sm:$0xff]
      %v830 = vld [vmem:[%s3 + $0x50] sm:$0xff]
      %v831 = vld [vmem:[%s3 + $0x58] sm:$0xff]
      %v832 = vld [vmem:[%s3 + $0x60] sm:$0xff]
      %v833 = vld [vmem:[%s3 + $0x68] sm:$0xff]
      %v834 = vld [vmem:[%s3 + $0x70] sm:$0xff]
      %v835 = vld [vmem:[%s3 + $0x78] sm:$0xff]
      %v836 = vld [vmem:[%s4] sm:$0x1]
      %v838 = vlaneseq
      %v839 = vshrl.u32 %v838, 7
      %v840 = vsub.s32 0, %v839
      %v841 = vrot.slane %v836, %v840
      %843 = vmatprep.subr.mxu0 0.0
      %844 = vmatpush1.msra.mxu0 %v835
      %845 = vmatprep.subr.mxu0 0.0
      %846 = vmatpush1.msra.mxu0 %v834
      %847 = vmatprep.subr.mxu0 0.0
      %848 = vmatpush1.msra.mxu0 %v833
      %849 = vmatprep.subr.mxu0 0.0
      %850 = vmatpush1.msra.mxu0 %v832
      %851 = vmatprep.subr.mxu0 0.0
      %852 = vmatpush1.msra.mxu0 %v831
      %853 = vmatprep.subr.mxu0 0.0
      %854 = vmatpush1.msra.mxu0 %v830
      %855 = vmatprep.subr.mxu0 0.0
      %856 = vmatpush1.msra.mxu0 %v829
      %857 = vmatprep.subr.mxu0 0.0
      %858 = vmatpush1.msra.mxu0 %v828
      %859 = vmatprep.subr.mxu0 0.0
      %860 = vmatpush1.msra.mxu0 %v827
      %861 = vmatprep.subr.mxu0 0.0
      %862 = vmatpush1.msra.mxu0 %v826
      %863 = vmatprep.subr.mxu0 0.0
      %864 = vmatpush1.msra.mxu0 %v825
      %865 = vmatprep.subr.mxu0 0.0
      %866 = vmatpush1.msra.mxu0 %v824
      %867 = vmatprep.subr.mxu0 0.0
      %868 = vmatpush1.msra.mxu0 %v823
      %869 = vmatprep.subr.mxu0 0.0
      %870 = vmatpush1.msra.mxu0 %v822
      %871 = vmatprep.subr.mxu0 0.0
      %872 = vmatpush1.msra.mxu0 %v821
      %873 = vmatprep.subr.mxu0 0.0
      %874 = vmatpush1.msra.mxu0 %v820
      %875 = vmatprep.subr.mxu0 0.0
      %876 = vmatpush2.msra.mxu0 0.0
      %877 = vmatprep.subr.mxu0 0.0
      %878 = vmatpush2.msra.mxu0 0.0
      %879 = vmatprep.subr.mxu0 0.0
      %880 = vmatpush2.msra.mxu0 0.0
      %881 = vmatprep.subr.mxu0 0.0
      %882 = vmatpush2.msra.mxu0 0.0
      %883 = vmatprep.subr.mxu0 0.0
      %884 = vmatpush2.msra.mxu0 0.0
      %885 = vmatprep.subr.mxu0 0.0
      %886 = vmatpush2.msra.mxu0 0.0
      %887 = vmatprep.subr.mxu0 0.0
      %888 = vmatpush2.msra.mxu0 0.0
      %889 = vmatprep.subr.mxu0 0.0
      %890 = vmatpush2.msra.mxu0 0.0
      %891 = vmatprep.subr.mxu0 0.0
      %892 = vmatpush2.msra.mxu0 0.0
      %893 = vmatprep.subr.mxu0 0.0
      %894 = vmatpush2.msra.mxu0 0.0
      %895 = vmatprep.subr.mxu0 0.0
      %896 = vmatpush2.msra.mxu0 0.0
      %897 = vmatprep.subr.mxu0 0.0
      %898 = vmatpush2.msra.mxu0 0.0
      %899 = vmatprep.subr.mxu0 0.0
      %900 = vmatpush2.msra.mxu0 0.0
      %901 = vmatprep.subr.mxu0 0.0
      %902 = vmatpush2.msra.mxu0 0.0
      %903 = vmatprep.subr.mxu0 0.0
      %904 = vmatpush2.msra.mxu0 0.0
      %905 = vmatprep.subr.mxu0 0.0
      %906 = vmatpush2.msra.mxu0 0.0
      %907 = vmatprep.mubr.f32.mxu0 0.0
      %908 = vmatmul.mubr.f32.gmra.mxu0 %v788
      %v909 = vpop.f32.mrf.mxu0
      %v910 = vadd.f32 %v841, %v909
      %v911 = vpop.f32.mrf.mxu0
      %912 = vmatprep.mubr.f32.mxu0 0.0
      %913 = vmatmul.mubr.f32.gmra.mxu0 %v789
      %v914 = vpop.f32.mrf.mxu0
      %v915 = vadd.f32 %v841, %v914
      %v916 = vpop.f32.mrf.mxu0
      %917 = vmatprep.mubr.f32.mxu0 0.0
      %918 = vmatmul.mubr.f32.gmra.mxu0 %v790
      %v919 = vpop.f32.mrf.mxu0
      %v920 = vadd.f32 %v841, %v919
      %v921 = vpop.f32.mrf.mxu0
      %922 = vmatprep.mubr.f32.mxu0 0.0
      %923 = vmatmul.mubr.f32.gmra.mxu0 %v791
      %v924 = vpop.f32.mrf.mxu0
      %v925 = vadd.f32 %v841, %v924
      %v926 = vpop.f32.mrf.mxu0
      %927 = vmatprep.mubr.f32.mxu0 0.0
      %928 = vmatmul.mubr.f32.gmra.mxu0 %v792
      %v929 = vpop.f32.mrf.mxu0
      %v930 = vadd.f32 %v841, %v929
      %v931 = vpop.f32.mrf.mxu0
      %932 = vmatprep.mubr.f32.mxu0 0.0
      %933 = vmatmul.mubr.f32.gmra.mxu0 %v793
      %v934 = vpop.f32.mrf.mxu0
      %v935 = vadd.f32 %v841, %v934
      %v936 = vpop.f32.mrf.mxu0
      %937 = vmatprep.mubr.f32.mxu0 0.0
      %938 = vmatmul.mubr.f32.gmra.mxu0 %v794
      %v939 = vpop.f32.mrf.mxu0
      %v940 = vadd.f32 %v841, %v939
      %v941 = vpop.f32.mrf.mxu0
      %942 = vmatprep.mubr.f32.mxu0 0.0
      %943 = vmatmul.mubr.f32.gmra.mxu0 %v795
      %v944 = vpop.f32.mrf.mxu0
      %v945 = vadd.f32 %v841, %v944
      %v946 = vpop.f32.mrf.mxu0
      %947 = vmatprep.mubr.f32.mxu0 0.0
      %948 = vmatmul.mubr.f32.gmra.mxu0 %v796
      %v949 = vpop.f32.mrf.mxu0
      %v950 = vadd.f32 %v841, %v949
      %v951 = vpop.f32.mrf.mxu0
      %952 = vmatprep.mubr.f32.mxu0 0.0
      %953 = vmatmul.mubr.f32.gmra.mxu0 %v797
      %v954 = vpop.f32.mrf.mxu0
      %v955 = vadd.f32 %v841, %v954
      %v956 = vpop.f32.mrf.mxu0
      %957 = vmatprep.mubr.f32.mxu0 0.0
      %958 = vmatmul.mubr.f32.gmra.mxu0 %v798
      %v959 = vpop.f32.mrf.mxu0
      %v960 = vadd.f32 %v841, %v959
      %v961 = vpop.f32.mrf.mxu0
      %962 = vmatprep.mubr.f32.mxu0 0.0
      %963 = vmatmul.mubr.f32.gmra.mxu0 %v799
      %v964 = vpop.f32.mrf.mxu0
      %v965 = vadd.f32 %v841, %v964
      %v966 = vpop.f32.mrf.mxu0
      %967 = vmatprep.mubr.f32.mxu0 0.0
      %968 = vmatmul.mubr.f32.gmra.mxu0 %v800
      %v969 = vpop.f32.mrf.mxu0
      %v970 = vadd.f32 %v841, %v969
      %v971 = vpop.f32.mrf.mxu0
      %972 = vmatprep.mubr.f32.mxu0 0.0
      %973 = vmatmul.mubr.f32.gmra.mxu0 %v801
      %v974 = vpop.f32.mrf.mxu0
      %v975 = vadd.f32 %v841, %v974
      %v976 = vpop.f32.mrf.mxu0
      %977 = vmatprep.mubr.f32.mxu0 0.0
      %978 = vmatmul.mubr.f32.gmra.mxu0 %v802
      %v979 = vpop.f32.mrf.mxu0
      %v980 = vadd.f32 %v841, %v979
      %v981 = vpop.f32.mrf.mxu0
      %982 = vmatprep.mubr.f32.mxu0 0.0
      %983 = vmatmul.mubr.f32.gmra.mxu0 %v803
      %v984 = vpop.f32.mrf.mxu0
      %v985 = vadd.f32 %v841, %v984
      %v986 = vpop.f32.mrf.mxu0
      %987 = vmatprep.mubr.f32.mxu0 0.0
      %988 = vmatmul.mubr.f32.gmra.mxu0 %v804
      %v989 = vpop.f32.mrf.mxu0
      %v990 = vadd.f32 %v841, %v989
      %v991 = vpop.f32.mrf.mxu0
      %992 = vmatprep.mubr.f32.mxu0 0.0
      %993 = vmatmul.mubr.f32.gmra.mxu0 %v805
      %v994 = vpop.f32.mrf.mxu0
      %v995 = vadd.f32 %v841, %v994
      %v996 = vpop.f32.mrf.mxu0
      %997 = vmatprep.mubr.f32.mxu0 0.0
      %998 = vmatmul.mubr.f32.gmra.mxu0 %v806
      %v999 = vpop.f32.mrf.mxu0
      %v1000 = vadd.f32 %v841, %v999
      %v1001 = vpop.f32.mrf.mxu0
      %1002 = vmatprep.mubr.f32.mxu0 0.0
      %1003 = vmatmul.mubr.f32.gmra.mxu0 %v807
      %v1004 = vpop.f32.mrf.mxu0
      %v1005 = vadd.f32 %v841, %v1004
      %v1006 = vpop.f32.mrf.mxu0
      %1007 = vmatprep.mubr.f32.mxu0 0.0
      %1008 = vmatmul.mubr.f32.gmra.mxu0 %v808
      %v1009 = vpop.f32.mrf.mxu0
      %v1010 = vadd.f32 %v841, %v1009
      %v1011 = vpop.f32.mrf.mxu0
      %1012 = vmatprep.mubr.f32.mxu0 0.0
      %1013 = vmatmul.mubr.f32.gmra.mxu0 %v809
      %v1014 = vpop.f32.mrf.mxu0
      %v1015 = vadd.f32 %v841, %v1014
      %v1016 = vpop.f32.mrf.mxu0
      %1017 = vmatprep.mubr.f32.mxu0 0.0
      %1018 = vmatmul.mubr.f32.gmra.mxu0 %v810
      %v1019 = vpop.f32.mrf.mxu0
      %v1020 = vadd.f32 %v841, %v1019
      %v1021 = vpop.f32.mrf.mxu0
      %1022 = vmatprep.mubr.f32.mxu0 0.0
      %1023 = vmatmul.mubr.f32.gmra.mxu0 %v811
      %v1024 = vpop.f32.mrf.mxu0
      %v1025 = vadd.f32 %v841, %v1024
      %v1026 = vpop.f32.mrf.mxu0
      %1027 = vmatprep.mubr.f32.mxu0 0.0
      %1028 = vmatmul.mubr.f32.gmra.mxu0 %v812
      %v1029 = vpop.f32.mrf.mxu0
      %v1030 = vadd.f32 %v841, %v1029
      %v1031 = vpop.f32.mrf.mxu0
      %1032 = vmatprep.mubr.f32.mxu0 0.0
      %1033 = vmatmul.mubr.f32.gmra.mxu0 %v813
      %v1034 = vpop.f32.mrf.mxu0
      %v1035 = vadd.f32 %v841, %v1034
      %v1036 = vpop.f32.mrf.mxu0
      %1037 = vmatprep.mubr.f32.mxu0 0.0
      %1038 = vmatmul.mubr.f32.gmra.mxu0 %v814
      %v1039 = vpop.f32.mrf.mxu0
      %v1040 = vadd.f32 %v841, %v1039
      %v1041 = vpop.f32.mrf.mxu0
      %1042 = vmatprep.mubr.f32.mxu0 0.0
      %1043 = vmatmul.mubr.f32.gmra.mxu0 %v815
      %v1044 = vpop.f32.mrf.mxu0
      %v1045 = vadd.f32 %v841, %v1044
      %v1046 = vpop.f32.mrf.mxu0
      %1047 = vmatprep.mubr.f32.mxu0 0.0
      %1048 = vmatmul.mubr.f32.gmra.mxu0 %v816
      %v1049 = vpop.f32.mrf.mxu0
      %v1050 = vadd.f32 %v841, %v1049
      %v1051 = vpop.f32.mrf.mxu0
      %1052 = vmatprep.mubr.f32.mxu0 0.0
      %1053 = vmatmul.mubr.f32.gmra.mxu0 %v817
      %v1054 = vpop.f32.mrf.mxu0
      %v1055 = vadd.f32 %v841, %v1054
      %v1056 = vpop.f32.mrf.mxu0
      %1057 = vmatprep.mubr.f32.mxu0 0.0
      %1058 = vmatmul.mubr.f32.gmra.mxu0 %v818
      %v1059 = vpop.f32.mrf.mxu0
      %v1060 = vadd.f32 %v841, %v1059
      %v1061 = vpop.f32.mrf.mxu0
      %1062 = vmatprep.mubr.f32.mxu0 0.0
      %1063 = vmatmul.mubr.f32.gmra.mxu0 %v819
      %v1064 = vpop.f32.mrf.mxu0
      %v1065 = vadd.f32 %v841, %v1064
      %v1066 = vpop.f32.mrf.mxu0
      %1067 = vdwg.mxu0
      %vm1068 = vcmp.gt.f32.partialorder %v910, 0.0
      %vm1069 = vcmp.gt.f32.partialorder %v915, 0.0
      %vm1070 = vcmp.gt.f32.partialorder %v920, 0.0
      %vm1071 = vcmp.gt.f32.partialorder %v925, 0.0
      %vm1072 = vcmp.gt.f32.partialorder %v930, 0.0
      %vm1073 = vcmp.gt.f32.partialorder %v935, 0.0
      %vm1074 = vcmp.gt.f32.partialorder %v940, 0.0
      %vm1075 = vcmp.gt.f32.partialorder %v945, 0.0
      %vm1076 = vcmp.gt.f32.partialorder %v950, 0.0
      %vm1077 = vcmp.gt.f32.partialorder %v955, 0.0
      %vm1078 = vcmp.gt.f32.partialorder %v960, 0.0
      %vm1079 = vcmp.gt.f32.partialorder %v965, 0.0
      %vm1080 = vcmp.gt.f32.partialorder %v970, 0.0
      %vm1081 = vcmp.gt.f32.partialorder %v975, 0.0
      %vm1082 = vcmp.gt.f32.partialorder %v980, 0.0
      %vm1083 = vcmp.gt.f32.partialorder %v985, 0.0
      %vm1084 = vcmp.gt.f32.partialorder %v990, 0.0
      %vm1085 = vcmp.gt.f32.partialorder %v995, 0.0
      %vm1086 = vcmp.gt.f32.partialorder %v1000, 0.0
      %vm1087 = vcmp.gt.f32.partialorder %v1005, 0.0
      %vm1088 = vcmp.gt.f32.partialorder %v1010, 0.0
      %vm1089 = vcmp.gt.f32.partialorder %v1015, 0.0
      %vm1090 = vcmp.gt.f32.partialorder %v1020, 0.0
      %vm1091 = vcmp.gt.f32.partialorder %v1025, 0.0
      %vm1092 = vcmp.gt.f32.partialorder %v1030, 0.0
      %vm1093 = vcmp.gt.f32.partialorder %v1035, 0.0
      %vm1094 = vcmp.gt.f32.partialorder %v1040, 0.0
      %vm1095 = vcmp.gt.f32.partialorder %v1045, 0.0
      %vm1096 = vcmp.gt.f32.partialorder %v1050, 0.0
      %vm1097 = vcmp.gt.f32.partialorder %v1055, 0.0
      %vm1098 = vcmp.gt.f32.partialorder %v1060, 0.0
      %vm1099 = vcmp.gt.f32.partialorder %v1065, 0.0
      %v1100 = vmul.f32 %v910, 0.01
      %v1101 = vmul.f32 %v915, 0.01
      %v1102 = vmul.f32 %v920, 0.01
      %v1103 = vmul.f32 %v925, 0.01
      %v1104 = vmul.f32 %v930, 0.01
      %v1105 = vmul.f32 %v935, 0.01
      %v1106 = vmul.f32 %v940, 0.01
      %v1107 = vmul.f32 %v945, 0.01
      %v1108 = vmul.f32 %v950, 0.01
      %v1109 = vmul.f32 %v955, 0.01
      %v1110 = vmul.f32 %v960, 0.01
      %v1111 = vmul.f32 %v965, 0.01
      %v1112 = vmul.f32 %v970, 0.01
      %v1113 = vmul.f32 %v975, 0.01
      %v1114 = vmul.f32 %v980, 0.01
      %v1115 = vmul.f32 %v985, 0.01
      %v1116 = vmul.f32 %v990, 0.01
      %v1117 = vmul.f32 %v995, 0.01
      %v1118 = vmul.f32 %v1000, 0.01
      %v1119 = vmul.f32 %v1005, 0.01
      %v1120 = vmul.f32 %v1010, 0.01
      %v1121 = vmul.f32 %v1015, 0.01
      %v1122 = vmul.f32 %v1020, 0.01
      %v1123 = vmul.f32 %v1025, 0.01
      %v1124 = vmul.f32 %v1030, 0.01
      %v1125 = vmul.f32 %v1035, 0.01
      %v1126 = vmul.f32 %v1040, 0.01
      %v1127 = vmul.f32 %v1045, 0.01
      %v1128 = vmul.f32 %v1050, 0.01
      %v1129 = vmul.f32 %v1055, 0.01
      %v1130 = vmul.f32 %v1060, 0.01
      %v1131 = vmul.f32 %v1065, 0.01
      %v1132 = vsel %vm1068, %v910, %v1100
      %v1133 = vsel %vm1069, %v915, %v1101
      %v1134 = vsel %vm1070, %v920, %v1102
      %v1135 = vsel %vm1071, %v925, %v1103
      %v1136 = vsel %vm1072, %v930, %v1104
      %v1137 = vsel %vm1073, %v935, %v1105
      %v1138 = vsel %vm1074, %v940, %v1106
      %v1139 = vsel %vm1075, %v945, %v1107
      %v1140 = vsel %vm1076, %v950, %v1108
      %v1141 = vsel %vm1077, %v955, %v1109
      %v1142 = vsel %vm1078, %v960, %v1110
      %v1143 = vsel %vm1079, %v965, %v1111
      %v1144 = vsel %vm1080, %v970, %v1112
      %v1145 = vsel %vm1081, %v975, %v1113
      %v1146 = vsel %vm1082, %v980, %v1114
      %v1147 = vsel %vm1083, %v985, %v1115
      %v1148 = vsel %vm1084, %v990, %v1116
      %v1149 = vsel %vm1085, %v995, %v1117
      %v1150 = vsel %vm1086, %v1000, %v1118
      %v1151 = vsel %vm1087, %v1005, %v1119
      %v1152 = vsel %vm1088, %v1010, %v1120
      %v1153 = vsel %vm1089, %v1015, %v1121
      %v1154 = vsel %vm1090, %v1020, %v1122
      %v1155 = vsel %vm1091, %v1025, %v1123
      %v1156 = vsel %vm1092, %v1030, %v1124
      %v1157 = vsel %vm1093, %v1035, %v1125
      %v1158 = vsel %vm1094, %v1040, %v1126
      %v1159 = vsel %vm1095, %v1045, %v1127
      %v1160 = vsel %vm1096, %v1050, %v1128
      %v1161 = vsel %vm1097, %v1055, %v1129
      %v1162 = vsel %vm1098, %v1060, %v1130
      %v1163 = vsel %vm1099, %v1065, %v1131
      %v1164 = vld [vmem:[%s5] sm:$0xff]
      %v1165 = vld [vmem:[%s5 + $0x8] sm:$0xff]
      %v1166 = vld [vmem:[%s5 + $0x10] sm:$0xff]
      %v1167 = vld [vmem:[%s5 + $0x18] sm:$0xff]
      %v1168 = vld [vmem:[%s5 + $0x20] sm:$0xff]
      %v1169 = vld [vmem:[%s5 + $0x28] sm:$0xff]
      %v1170 = vld [vmem:[%s5 + $0x30] sm:$0xff]
      %v1171 = vld [vmem:[%s5 + $0x38] sm:$0xff]
      %v1172 = vld [vmem:[%s5 + $0x40] sm:$0xff]
      %v1173 = vld [vmem:[%s5 + $0x48] sm:$0xff]
      %v1174 = vld [vmem:[%s5 + $0x50] sm:$0xff]
      %v1175 = vld [vmem:[%s5 + $0x58] sm:$0xff]
      %v1176 = vld [vmem:[%s5 + $0x60] sm:$0xff]
      %v1177 = vld [vmem:[%s5 + $0x68] sm:$0xff]
      %v1178 = vld [vmem:[%s5 + $0x70] sm:$0xff]
      %v1179 = vld [vmem:[%s5 + $0x78] sm:$0xff]
      %v1180 = vld [vmem:[%s6] sm:$0x1]
      %v1182 = vlaneseq
      %v1183 = vshrl.u32 %v1182, 7
      %v1184 = vsub.s32 0, %v1183
      %v1185 = vrot.slane %v1180, %v1184
      %1187 = vmatprep.subr.mxu0 0.0
      %1188 = vmatpush1.msra.mxu0 %v1179
      %1189 = vmatprep.subr.mxu0 0.0
      %1190 = vmatpush1.msra.mxu0 %v1178
      %1191 = vmatprep.subr.mxu0 0.0
      %1192 = vmatpush1.msra.mxu0 %v1177
      %1193 = vmatprep.subr.mxu0 0.0
      %1194 = vmatpush1.msra.mxu0 %v1176
      %1195 = vmatprep.subr.mxu0 0.0
      %1196 = vmatpush1.msra.mxu0 %v1175
      %1197 = vmatprep.subr.mxu0 0.0
      %1198 = vmatpush1.msra.mxu0 %v1174
      %1199 = vmatprep.subr.mxu0 0.0
      %1200 = vmatpush1.msra.mxu0 %v1173
      %1201 = vmatprep.subr.mxu0 0.0
      %1202 = vmatpush1.msra.mxu0 %v1172
      %1203 = vmatprep.subr.mxu0 0.0
      %1204 = vmatpush1.msra.mxu0 %v1171
      %1205 = vmatprep.subr.mxu0 0.0
      %1206 = vmatpush1.msra.mxu0 %v1170
      %1207 = vmatprep.subr.mxu0 0.0
      %1208 = vmatpush1.msra.mxu0 %v1169
      %1209 = vmatprep.subr.mxu0 0.0
      %1210 = vmatpush1.msra.mxu0 %v1168
      %1211 = vmatprep.subr.mxu0 0.0
      %1212 = vmatpush1.msra.mxu0 %v1167
      %1213 = vmatprep.subr.mxu0 0.0
      %1214 = vmatpush1.msra.mxu0 %v1166
      %1215 = vmatprep.subr.mxu0 0.0
      %1216 = vmatpush1.msra.mxu0 %v1165
      %1217 = vmatprep.subr.mxu0 0.0
      %1218 = vmatpush1.msra.mxu0 %v1164
      %1219 = vmatprep.subr.mxu0 0.0
      %1220 = vmatpush2.msra.mxu0 0.0
      %1221 = vmatprep.subr.mxu0 0.0
      %1222 = vmatpush2.msra.mxu0 0.0
      %1223 = vmatprep.subr.mxu0 0.0
      %1224 = vmatpush2.msra.mxu0 0.0
      %1225 = vmatprep.subr.mxu0 0.0
      %1226 = vmatpush2.msra.mxu0 0.0
      %1227 = vmatprep.subr.mxu0 0.0
      %1228 = vmatpush2.msra.mxu0 0.0
      %1229 = vmatprep.subr.mxu0 0.0
      %1230 = vmatpush2.msra.mxu0 0.0
      %1231 = vmatprep.subr.mxu0 0.0
      %1232 = vmatpush2.msra.mxu0 0.0
      %1233 = vmatprep.subr.mxu0 0.0
      %1234 = vmatpush2.msra.mxu0 0.0
      %1235 = vmatprep.subr.mxu0 0.0
      %1236 = vmatpush2.msra.mxu0 0.0
      %1237 = vmatprep.subr.mxu0 0.0
      %1238 = vmatpush2.msra.mxu0 0.0
      %1239 = vmatprep.subr.mxu0 0.0
      %1240 = vmatpush2.msra.mxu0 0.0
      %1241 = vmatprep.subr.mxu0 0.0
      %1242 = vmatpush2.msra.mxu0 0.0
      %1243 = vmatprep.subr.mxu0 0.0
      %1244 = vmatpush2.msra.mxu0 0.0
      %1245 = vmatprep.subr.mxu0 0.0
      %1246 = vmatpush2.msra.mxu0 0.0
      %1247 = vmatprep.subr.mxu0 0.0
      %1248 = vmatpush2.msra.mxu0 0.0
      %1249 = vmatprep.subr.mxu0 0.0
      %1250 = vmatpush2.msra.mxu0 0.0
      %1251 = vmatprep.mubr.f32.mxu0 0.0
      %1252 = vmatmul.mubr.f32.gmra.mxu0 %v1132
      %v1253 = vpop.f32.mrf.mxu0
      %v1254 = vadd.f32 %v1185, %v1253
      %v1255 = vpop.f32.mrf.mxu0
      %1256 = vmatprep.mubr.f32.mxu0 0.0
      %1257 = vmatmul.mubr.f32.gmra.mxu0 %v1133
      %v1258 = vpop.f32.mrf.mxu0
      %v1259 = vadd.f32 %v1185, %v1258
      %v1260 = vpop.f32.mrf.mxu0
      %1261 = vmatprep.mubr.f32.mxu0 0.0
      %1262 = vmatmul.mubr.f32.gmra.mxu0 %v1134
      %v1263 = vpop.f32.mrf.mxu0
      %v1264 = vadd.f32 %v1185, %v1263
      %v1265 = vpop.f32.mrf.mxu0
      %1266 = vmatprep.mubr.f32.mxu0 0.0
      %1267 = vmatmul.mubr.f32.gmra.mxu0 %v1135
      %v1268 = vpop.f32.mrf.mxu0
      %v1269 = vadd.f32 %v1185, %v1268
      %v1270 = vpop.f32.mrf.mxu0
      %1271 = vmatprep.mubr.f32.mxu0 0.0
      %1272 = vmatmul.mubr.f32.gmra.mxu0 %v1136
      %v1273 = vpop.f32.mrf.mxu0
      %v1274 = vadd.f32 %v1185, %v1273
      %v1275 = vpop.f32.mrf.mxu0
      %1276 = vmatprep.mubr.f32.mxu0 0.0
      %1277 = vmatmul.mubr.f32.gmra.mxu0 %v1137
      %v1278 = vpop.f32.mrf.mxu0
      %v1279 = vadd.f32 %v1185, %v1278
      %v1280 = vpop.f32.mrf.mxu0
      %1281 = vmatprep.mubr.f32.mxu0 0.0
      %1282 = vmatmul.mubr.f32.gmra.mxu0 %v1138
      %v1283 = vpop.f32.mrf.mxu0
      %v1284 = vadd.f32 %v1185, %v1283
      %v1285 = vpop.f32.mrf.mxu0
      %1286 = vmatprep.mubr.f32.mxu0 0.0
      %1287 = vmatmul.mubr.f32.gmra.mxu0 %v1139
      %v1288 = vpop.f32.mrf.mxu0
      %v1289 = vadd.f32 %v1185, %v1288
      %v1290 = vpop.f32.mrf.mxu0
      %1291 = vmatprep.mubr.f32.mxu0 0.0
      %1292 = vmatmul.mubr.f32.gmra.mxu0 %v1140
      %v1293 = vpop.f32.mrf.mxu0
      %v1294 = vadd.f32 %v1185, %v1293
      %v1295 = vpop.f32.mrf.mxu0
      %1296 = vmatprep.mubr.f32.mxu0 0.0
      %1297 = vmatmul.mubr.f32.gmra.mxu0 %v1141
      %v1298 = vpop.f32.mrf.mxu0
      %v1299 = vadd.f32 %v1185, %v1298
      %v1300 = vpop.f32.mrf.mxu0
      %1301 = vmatprep.mubr.f32.mxu0 0.0
      %1302 = vmatmul.mubr.f32.gmra.mxu0 %v1142
      %v1303 = vpop.f32.mrf.mxu0
      %v1304 = vadd.f32 %v1185, %v1303
      %v1305 = vpop.f32.mrf.mxu0
      %1306 = vmatprep.mubr.f32.mxu0 0.0
      %1307 = vmatmul.mubr.f32.gmra.mxu0 %v1143
      %v1308 = vpop.f32.mrf.mxu0
      %v1309 = vadd.f32 %v1185, %v1308
      %v1310 = vpop.f32.mrf.mxu0
      %1311 = vmatprep.mubr.f32.mxu0 0.0
      %1312 = vmatmul.mubr.f32.gmra.mxu0 %v1144
      %v1313 = vpop.f32.mrf.mxu0
      %v1314 = vadd.f32 %v1185, %v1313
      %v1315 = vpop.f32.mrf.mxu0
      %1316 = vmatprep.mubr.f32.mxu0 0.0
      %1317 = vmatmul.mubr.f32.gmra.mxu0 %v1145
      %v1318 = vpop.f32.mrf.mxu0
      %v1319 = vadd.f32 %v1185, %v1318
      %v1320 = vpop.f32.mrf.mxu0
      %1321 = vmatprep.mubr.f32.mxu0 0.0
      %1322 = vmatmul.mubr.f32.gmra.mxu0 %v1146
      %v1323 = vpop.f32.mrf.mxu0
      %v1324 = vadd.f32 %v1185, %v1323
      %v1325 = vpop.f32.mrf.mxu0
      %1326 = vmatprep.mubr.f32.mxu0 0.0
      %1327 = vmatmul.mubr.f32.gmra.mxu0 %v1147
      %v1328 = vpop.f32.mrf.mxu0
      %v1329 = vadd.f32 %v1185, %v1328
      %v1330 = vpop.f32.mrf.mxu0
      %1331 = vmatprep.mubr.f32.mxu0 0.0
      %1332 = vmatmul.mubr.f32.gmra.mxu0 %v1148
      %v1333 = vpop.f32.mrf.mxu0
      %v1334 = vadd.f32 %v1185, %v1333
      %v1335 = vpop.f32.mrf.mxu0
      %1336 = vmatprep.mubr.f32.mxu0 0.0
      %1337 = vmatmul.mubr.f32.gmra.mxu0 %v1149
      %v1338 = vpop.f32.mrf.mxu0
      %v1339 = vadd.f32 %v1185, %v1338
      %v1340 = vpop.f32.mrf.mxu0
      %1341 = vmatprep.mubr.f32.mxu0 0.0
      %1342 = vmatmul.mubr.f32.gmra.mxu0 %v1150
      %v1343 = vpop.f32.mrf.mxu0
      %v1344 = vadd.f32 %v1185, %v1343
      %v1345 = vpop.f32.mrf.mxu0
      %1346 = vmatprep.mubr.f32.mxu0 0.0
      %1347 = vmatmul.mubr.f32.gmra.mxu0 %v1151
      %v1348 = vpop.f32.mrf.mxu0
      %v1349 = vadd.f32 %v1185, %v1348
      %v1350 = vpop.f32.mrf.mxu0
      %1351 = vmatprep.mubr.f32.mxu0 0.0
      %1352 = vmatmul.mubr.f32.gmra.mxu0 %v1152
      %v1353 = vpop.f32.mrf.mxu0
      %v1354 = vadd.f32 %v1185, %v1353
      %v1355 = vpop.f32.mrf.mxu0
      %1356 = vmatprep.mubr.f32.mxu0 0.0
      %1357 = vmatmul.mubr.f32.gmra.mxu0 %v1153
      %v1358 = vpop.f32.mrf.mxu0
      %v1359 = vadd.f32 %v1185, %v1358
      %v1360 = vpop.f32.mrf.mxu0
      %1361 = vmatprep.mubr.f32.mxu0 0.0
      %1362 = vmatmul.mubr.f32.gmra.mxu0 %v1154
      %v1363 = vpop.f32.mrf.mxu0
      %v1364 = vadd.f32 %v1185, %v1363
      %v1365 = vpop.f32.mrf.mxu0
      %1366 = vmatprep.mubr.f32.mxu0 0.0
      %1367 = vmatmul.mubr.f32.gmra.mxu0 %v1155
      %v1368 = vpop.f32.mrf.mxu0
      %v1369 = vadd.f32 %v1185, %v1368
      %v1370 = vpop.f32.mrf.mxu0
      %1371 = vmatprep.mubr.f32.mxu0 0.0
      %1372 = vmatmul.mubr.f32.gmra.mxu0 %v1156
      %v1373 = vpop.f32.mrf.mxu0
      %v1374 = vadd.f32 %v1185, %v1373
      %v1375 = vpop.f32.mrf.mxu0
      %1376 = vmatprep.mubr.f32.mxu0 0.0
      %1377 = vmatmul.mubr.f32.gmra.mxu0 %v1157
      %v1378 = vpop.f32.mrf.mxu0
      %v1379 = vadd.f32 %v1185, %v1378
      %v1380 = vpop.f32.mrf.mxu0
      %1381 = vmatprep.mubr.f32.mxu0 0.0
      %1382 = vmatmul.mubr.f32.gmra.mxu0 %v1158
      %v1383 = vpop.f32.mrf.mxu0
      %v1384 = vadd.f32 %v1185, %v1383
      %v1385 = vpop.f32.mrf.mxu0
      %1386 = vmatprep.mubr.f32.mxu0 0.0
      %1387 = vmatmul.mubr.f32.gmra.mxu0 %v1159
      %v1388 = vpop.f32.mrf.mxu0
      %v1389 = vadd.f32 %v1185, %v1388
      %v1390 = vpop.f32.mrf.mxu0
      %1391 = vmatprep.mubr.f32.mxu0 0.0
      %1392 = vmatmul.mubr.f32.gmra.mxu0 %v1160
      %v1393 = vpop.f32.mrf.mxu0
      %v1394 = vadd.f32 %v1185, %v1393
      %v1395 = vpop.f32.mrf.mxu0
      %1396 = vmatprep.mubr.f32.mxu0 0.0
      %1397 = vmatmul.mubr.f32.gmra.mxu0 %v1161
      %v1398 = vpop.f32.mrf.mxu0
      %v1399 = vadd.f32 %v1185, %v1398
      %v1400 = vpop.f32.mrf.mxu0
      %1401 = vmatprep.mubr.f32.mxu0 0.0
      %1402 = vmatmul.mubr.f32.gmra.mxu0 %v1162
      %v1403 = vpop.f32.mrf.mxu0
      %v1404 = vadd.f32 %v1185, %v1403
      %v1405 = vpop.f32.mrf.mxu0
      %1406 = vmatprep.mubr.f32.mxu0 0.0
      %1407 = vmatmul.mubr.f32.gmra.mxu0 %v1163
      %v1408 = vpop.f32.mrf.mxu0
      %v1409 = vadd.f32 %v1185, %v1408
      %v1410 = vpop.f32.mrf.mxu0
      %1411 = vdwg.mxu0
      %vm1412 = vcmp.gt.f32.partialorder %v1254, 0.0
      %vm1413 = vcmp.gt.f32.partialorder %v1259, 0.0
      %vm1414 = vcmp.gt.f32.partialorder %v1264, 0.0
      %vm1415 = vcmp.gt.f32.partialorder %v1269, 0.0
      %vm1416 = vcmp.gt.f32.partialorder %v1274, 0.0
      %vm1417 = vcmp.gt.f32.partialorder %v1279, 0.0
      %vm1418 = vcmp.gt.f32.partialorder %v1284, 0.0
      %vm1419 = vcmp.gt.f32.partialorder %v1289, 0.0
      %vm1420 = vcmp.gt.f32.partialorder %v1294, 0.0
      %vm1421 = vcmp.gt.f32.partialorder %v1299, 0.0
      %vm1422 = vcmp.gt.f32.partialorder %v1304, 0.0
      %vm1423 = vcmp.gt.f32.partialorder %v1309, 0.0
      %vm1424 = vcmp.gt.f32.partialorder %v1314, 0.0
      %vm1425 = vcmp.gt.f32.partialorder %v1319, 0.0
      %vm1426 = vcmp.gt.f32.partialorder %v1324, 0.0
      %vm1427 = vcmp.gt.f32.partialorder %v1329, 0.0
      %vm1428 = vcmp.gt.f32.partialorder %v1334, 0.0
      %vm1429 = vcmp.gt.f32.partialorder %v1339, 0.0
      %vm1430 = vcmp.gt.f32.partialorder %v1344, 0.0
      %vm1431 = vcmp.gt.f32.partialorder %v1349, 0.0
      %vm1432 = vcmp.gt.f32.partialorder %v1354, 0.0
      %vm1433 = vcmp.gt.f32.partialorder %v1359, 0.0
      %vm1434 = vcmp.gt.f32.partialorder %v1364, 0.0
      %vm1435 = vcmp.gt.f32.partialorder %v1369, 0.0
      %vm1436 = vcmp.gt.f32.partialorder %v1374, 0.0
      %vm1437 = vcmp.gt.f32.partialorder %v1379, 0.0
      %vm1438 = vcmp.gt.f32.partialorder %v1384, 0.0
      %vm1439 = vcmp.gt.f32.partialorder %v1389, 0.0
      %vm1440 = vcmp.gt.f32.partialorder %v1394, 0.0
      %vm1441 = vcmp.gt.f32.partialorder %v1399, 0.0
      %vm1442 = vcmp.gt.f32.partialorder %v1404, 0.0
      %vm1443 = vcmp.gt.f32.partialorder %v1409, 0.0
      %v1444 = vmul.f32 %v1254, 0.01
      %v1445 = vmul.f32 %v1259, 0.01
      %v1446 = vmul.f32 %v1264, 0.01
      %v1447 = vmul.f32 %v1269, 0.01
      %v1448 = vmul.f32 %v1274, 0.01
      %v1449 = vmul.f32 %v1279, 0.01
      %v1450 = vmul.f32 %v1284, 0.01
      %v1451 = vmul.f32 %v1289, 0.01
      %v1452 = vmul.f32 %v1294, 0.01
      %v1453 = vmul.f32 %v1299, 0.01
      %v1454 = vmul.f32 %v1304, 0.01
      %v1455 = vmul.f32 %v1309, 0.01
      %v1456 = vmul.f32 %v1314, 0.01
      %v1457 = vmul.f32 %v1319, 0.01
      %v1458 = vmul.f32 %v1324, 0.01
      %v1459 = vmul.f32 %v1329, 0.01
      %v1460 = vmul.f32 %v1334, 0.01
      %v1461 = vmul.f32 %v1339, 0.01
      %v1462 = vmul.f32 %v1344, 0.01
      %v1463 = vmul.f32 %v1349, 0.01
      %v1464 = vmul.f32 %v1354, 0.01
      %v1465 = vmul.f32 %v1359, 0.01
      %v1466 = vmul.f32 %v1364, 0.01
      %v1467 = vmul.f32 %v1369, 0.01
      %v1468 = vmul.f32 %v1374, 0.01
      %v1469 = vmul.f32 %v1379, 0.01
      %v1470 = vmul.f32 %v1384, 0.01
      %v1471 = vmul.f32 %v1389, 0.01
      %v1472 = vmul.f32 %v1394, 0.01
      %v1473 = vmul.f32 %v1399, 0.01
      %v1474 = vmul.f32 %v1404, 0.01
      %v1475 = vmul.f32 %v1409, 0.01
      %v1476 = vsel %vm1412, %v1254, %v1444
      %v1477 = vsel %vm1413, %v1259, %v1445
      %v1478 = vsel %vm1414, %v1264, %v1446
      %v1479 = vsel %vm1415, %v1269, %v1447
      %v1480 = vsel %vm1416, %v1274, %v1448
      %v1481 = vsel %vm1417, %v1279, %v1449
      %v1482 = vsel %vm1418, %v1284, %v1450
      %v1483 = vsel %vm1419, %v1289, %v1451
      %v1484 = vsel %vm1420, %v1294, %v1452
      %v1485 = vsel %vm1421, %v1299, %v1453
      %v1486 = vsel %vm1422, %v1304, %v1454
      %v1487 = vsel %vm1423, %v1309, %v1455
      %v1488 = vsel %vm1424, %v1314, %v1456
      %v1489 = vsel %vm1425, %v1319, %v1457
      %v1490 = vsel %vm1426, %v1324, %v1458
      %v1491 = vsel %vm1427, %v1329, %v1459
      %v1492 = vsel %vm1428, %v1334, %v1460
      %v1493 = vsel %vm1429, %v1339, %v1461
      %v1494 = vsel %vm1430, %v1344, %v1462
      %v1495 = vsel %vm1431, %v1349, %v1463
      %v1496 = vsel %vm1432, %v1354, %v1464
      %v1497 = vsel %vm1433, %v1359, %v1465
      %v1498 = vsel %vm1434, %v1364, %v1466
      %v1499 = vsel %vm1435, %v1369, %v1467
      %v1500 = vsel %vm1436, %v1374, %v1468
      %v1501 = vsel %vm1437, %v1379, %v1469
      %v1502 = vsel %vm1438, %v1384, %v1470
      %v1503 = vsel %vm1439, %v1389, %v1471
      %v1504 = vsel %vm1440, %v1394, %v1472
      %v1505 = vsel %vm1441, %v1399, %v1473
      %v1506 = vsel %vm1442, %v1404, %v1474
      %v1507 = vsel %vm1443, %v1409, %v1475
      %v1508 = vld [vmem:[%s7] sm:$0xff]
      %v1509 = vld [vmem:[%s7 + $0x8] sm:$0xff]
      %v1510 = vld [vmem:[%s7 + $0x10] sm:$0xff]
      %v1511 = vld [vmem:[%s7 + $0x18] sm:$0xff]
      %v1512 = vld [vmem:[%s7 + $0x20] sm:$0xff]
      %v1513 = vld [vmem:[%s7 + $0x28] sm:$0xff]
      %v1514 = vld [vmem:[%s7 + $0x30] sm:$0xff]
      %v1515 = vld [vmem:[%s7 + $0x38] sm:$0xff]
      %v1516 = vld [vmem:[%s7 + $0x40] sm:$0xff]
      %v1517 = vld [vmem:[%s7 + $0x48] sm:$0xff]
      %v1518 = vld [vmem:[%s7 + $0x50] sm:$0xff]
      %v1519 = vld [vmem:[%s7 + $0x58] sm:$0xff]
      %v1520 = vld [vmem:[%s7 + $0x60] sm:$0xff]
      %v1521 = vld [vmem:[%s7 + $0x68] sm:$0xff]
      %v1522 = vld [vmem:[%s7 + $0x70] sm:$0xff]
      %v1523 = vld [vmem:[%s7 + $0x78] sm:$0xff]
      %v1524 = vld [vmem:[%s8] sm:$0x1]
      %v1526 = vlaneseq
      %v1527 = vshrl.u32 %v1526, 7
      %v1528 = vsub.s32 0, %v1527
      %v1529 = vrot.slane %v1524, %v1528
      %1531 = vmatprep.subr.mxu0 0.0
      %1532 = vmatpush1.msra.mxu0 %v1523
      %1533 = vmatprep.subr.mxu0 0.0
      %1534 = vmatpush1.msra.mxu0 %v1522
      %1535 = vmatprep.subr.mxu0 0.0
      %1536 = vmatpush1.msra.mxu0 %v1521
      %1537 = vmatprep.subr.mxu0 0.0
      %1538 = vmatpush1.msra.mxu0 %v1520
      %1539 = vmatprep.subr.mxu0 0.0
      %1540 = vmatpush1.msra.mxu0 %v1519
      %1541 = vmatprep.subr.mxu0 0.0
      %1542 = vmatpush1.msra.mxu0 %v1518
      %1543 = vmatprep.subr.mxu0 0.0
      %1544 = vmatpush1.msra.mxu0 %v1517
      %1545 = vmatprep.subr.mxu0 0.0
      %1546 = vmatpush1.msra.mxu0 %v1516
      %1547 = vmatprep.subr.mxu0 0.0
      %1548 = vmatpush1.msra.mxu0 %v1515
      %1549 = vmatprep.subr.mxu0 0.0
      %1550 = vmatpush1.msra.mxu0 %v1514
      %1551 = vmatprep.subr.mxu0 0.0
      %1552 = vmatpush1.msra.mxu0 %v1513
      %1553 = vmatprep.subr.mxu0 0.0
      %1554 = vmatpush1.msra.mxu0 %v1512
      %1555 = vmatprep.subr.mxu0 0.0
      %1556 = vmatpush1.msra.mxu0 %v1511
      %1557 = vmatprep.subr.mxu0 0.0
      %1558 = vmatpush1.msra.mxu0 %v1510
      %1559 = vmatprep.subr.mxu0 0.0
      %1560 = vmatpush1.msra.mxu0 %v1509
      %1561 = vmatprep.subr.mxu0 0.0
      %1562 = vmatpush1.msra.mxu0 %v1508
      %1563 = vmatprep.subr.mxu0 0.0
      %1564 = vmatpush2.msra.mxu0 0.0
      %1565 = vmatprep.subr.mxu0 0.0
      %1566 = vmatpush2.msra.mxu0 0.0
      %1567 = vmatprep.subr.mxu0 0.0
      %1568 = vmatpush2.msra.mxu0 0.0
      %1569 = vmatprep.subr.mxu0 0.0
      %1570 = vmatpush2.msra.mxu0 0.0
      %1571 = vmatprep.subr.mxu0 0.0
      %1572 = vmatpush2.msra.mxu0 0.0
      %1573 = vmatprep.subr.mxu0 0.0
      %1574 = vmatpush2.msra.mxu0 0.0
      %1575 = vmatprep.subr.mxu0 0.0
      %1576 = vmatpush2.msra.mxu0 0.0
      %1577 = vmatprep.subr.mxu0 0.0
      %1578 = vmatpush2.msra.mxu0 0.0
      %1579 = vmatprep.subr.mxu0 0.0
      %1580 = vmatpush2.msra.mxu0 0.0
      %1581 = vmatprep.subr.mxu0 0.0
      %1582 = vmatpush2.msra.mxu0 0.0
      %1583 = vmatprep.subr.mxu0 0.0
      %1584 = vmatpush2.msra.mxu0 0.0
      %1585 = vmatprep.subr.mxu0 0.0
      %1586 = vmatpush2.msra.mxu0 0.0
      %1587 = vmatprep.subr.mxu0 0.0
      %1588 = vmatpush2.msra.mxu0 0.0
      %1589 = vmatprep.subr.mxu0 0.0
      %1590 = vmatpush2.msra.mxu0 0.0
      %1591 = vmatprep.subr.mxu0 0.0
      %1592 = vmatpush2.msra.mxu0 0.0
      %1593 = vmatprep.subr.mxu0 0.0
      %1594 = vmatpush2.msra.mxu0 0.0
      %1595 = vmatprep.mubr.f32.mxu0 0.0
      %1596 = vmatmul.mubr.f32.gmra.mxu0 %v1476
      %v1597 = vpop.f32.mrf.mxu0
      %v1598 = vadd.f32 %v1529, %v1597
      %v1599 = vpop.f32.mrf.mxu0
      %1600 = vmatprep.mubr.f32.mxu0 0.0
      %1601 = vmatmul.mubr.f32.gmra.mxu0 %v1477
      %v1602 = vpop.f32.mrf.mxu0
      %v1603 = vadd.f32 %v1529, %v1602
      %v1604 = vpop.f32.mrf.mxu0
      %1605 = vmatprep.mubr.f32.mxu0 0.0
      %1606 = vmatmul.mubr.f32.gmra.mxu0 %v1478
      %v1607 = vpop.f32.mrf.mxu0
      %v1608 = vadd.f32 %v1529, %v1607
      %v1609 = vpop.f32.mrf.mxu0
      %1610 = vmatprep.mubr.f32.mxu0 0.0
      %1611 = vmatmul.mubr.f32.gmra.mxu0 %v1479
      %v1612 = vpop.f32.mrf.mxu0
      %v1613 = vadd.f32 %v1529, %v1612
      %v1614 = vpop.f32.mrf.mxu0
      %1615 = vmatprep.mubr.f32.mxu0 0.0
      %1616 = vmatmul.mubr.f32.gmra.mxu0 %v1480
      %v1617 = vpop.f32.mrf.mxu0
      %v1618 = vadd.f32 %v1529, %v1617
      %v1619 = vpop.f32.mrf.mxu0
      %1620 = vmatprep.mubr.f32.mxu0 0.0
      %1621 = vmatmul.mubr.f32.gmra.mxu0 %v1481
      %v1622 = vpop.f32.mrf.mxu0
      %v1623 = vadd.f32 %v1529, %v1622
      %v1624 = vpop.f32.mrf.mxu0
      %1625 = vmatprep.mubr.f32.mxu0 0.0
      %1626 = vmatmul.mubr.f32.gmra.mxu0 %v1482
      %v1627 = vpop.f32.mrf.mxu0
      %v1628 = vadd.f32 %v1529, %v1627
      %v1629 = vpop.f32.mrf.mxu0
      %1630 = vmatprep.mubr.f32.mxu0 0.0
      %1631 = vmatmul.mubr.f32.gmra.mxu0 %v1483
      %v1632 = vpop.f32.mrf.mxu0
      %v1633 = vadd.f32 %v1529, %v1632
      %v1634 = vpop.f32.mrf.mxu0
      %1635 = vmatprep.mubr.f32.mxu0 0.0
      %1636 = vmatmul.mubr.f32.gmra.mxu0 %v1484
      %v1637 = vpop.f32.mrf.mxu0
      %v1638 = vadd.f32 %v1529, %v1637
      %v1639 = vpop.f32.mrf.mxu0
      %1640 = vmatprep.mubr.f32.mxu0 0.0
      %1641 = vmatmul.mubr.f32.gmra.mxu0 %v1485
      %v1642 = vpop.f32.mrf.mxu0
      %v1643 = vadd.f32 %v1529, %v1642
      %v1644 = vpop.f32.mrf.mxu0
      %1645 = vmatprep.mubr.f32.mxu0 0.0
      %1646 = vmatmul.mubr.f32.gmra.mxu0 %v1486
      %v1647 = vpop.f32.mrf.mxu0
      %v1648 = vadd.f32 %v1529, %v1647
      %v1649 = vpop.f32.mrf.mxu0
      %1650 = vmatprep.mubr.f32.mxu0 0.0
      %1651 = vmatmul.mubr.f32.gmra.mxu0 %v1487
      %v1652 = vpop.f32.mrf.mxu0
      %v1653 = vadd.f32 %v1529, %v1652
      %v1654 = vpop.f32.mrf.mxu0
      %1655 = vmatprep.mubr.f32.mxu0 0.0
      %1656 = vmatmul.mubr.f32.gmra.mxu0 %v1488
      %v1657 = vpop.f32.mrf.mxu0
      %v1658 = vadd.f32 %v1529, %v1657
      %v1659 = vpop.f32.mrf.mxu0
      %1660 = vmatprep.mubr.f32.mxu0 0.0
      %1661 = vmatmul.mubr.f32.gmra.mxu0 %v1489
      %v1662 = vpop.f32.mrf.mxu0
      %v1663 = vadd.f32 %v1529, %v1662
      %v1664 = vpop.f32.mrf.mxu0
      %1665 = vmatprep.mubr.f32.mxu0 0.0
      %1666 = vmatmul.mubr.f32.gmra.mxu0 %v1490
      %v1667 = vpop.f32.mrf.mxu0
      %v1668 = vadd.f32 %v1529, %v1667
      %v1669 = vpop.f32.mrf.mxu0
      %1670 = vmatprep.mubr.f32.mxu0 0.0
      %1671 = vmatmul.mubr.f32.gmra.mxu0 %v1491
      %v1672 = vpop.f32.mrf.mxu0
      %v1673 = vadd.f32 %v1529, %v1672
      %v1674 = vpop.f32.mrf.mxu0
      %1675 = vmatprep.mubr.f32.mxu0 0.0
      %1676 = vmatmul.mubr.f32.gmra.mxu0 %v1492
      %v1677 = vpop.f32.mrf.mxu0
      %v1678 = vadd.f32 %v1529, %v1677
      %v1679 = vpop.f32.mrf.mxu0
      %1680 = vmatprep.mubr.f32.mxu0 0.0
      %1681 = vmatmul.mubr.f32.gmra.mxu0 %v1493
      %v1682 = vpop.f32.mrf.mxu0
      %v1683 = vadd.f32 %v1529, %v1682
      %v1684 = vpop.f32.mrf.mxu0
      %1685 = vmatprep.mubr.f32.mxu0 0.0
      %1686 = vmatmul.mubr.f32.gmra.mxu0 %v1494
      %v1687 = vpop.f32.mrf.mxu0
      %v1688 = vadd.f32 %v1529, %v1687
      %v1689 = vpop.f32.mrf.mxu0
      %1690 = vmatprep.mubr.f32.mxu0 0.0
      %1691 = vmatmul.mubr.f32.gmra.mxu0 %v1495
      %v1692 = vpop.f32.mrf.mxu0
      %v1693 = vadd.f32 %v1529, %v1692
      %v1694 = vpop.f32.mrf.mxu0
      %1695 = vmatprep.mubr.f32.mxu0 0.0
      %1696 = vmatmul.mubr.f32.gmra.mxu0 %v1496
      %v1697 = vpop.f32.mrf.mxu0
      %v1698 = vadd.f32 %v1529, %v1697
      %v1699 = vpop.f32.mrf.mxu0
      %1700 = vmatprep.mubr.f32.mxu0 0.0
      %1701 = vmatmul.mubr.f32.gmra.mxu0 %v1497
      %v1702 = vpop.f32.mrf.mxu0
      %v1703 = vadd.f32 %v1529, %v1702
      %v1704 = vpop.f32.mrf.mxu0
      %1705 = vmatprep.mubr.f32.mxu0 0.0
      %1706 = vmatmul.mubr.f32.gmra.mxu0 %v1498
      %v1707 = vpop.f32.mrf.mxu0
      %v1708 = vadd.f32 %v1529, %v1707
      %v1709 = vpop.f32.mrf.mxu0
      %1710 = vmatprep.mubr.f32.mxu0 0.0
      %1711 = vmatmul.mubr.f32.gmra.mxu0 %v1499
      %v1712 = vpop.f32.mrf.mxu0
      %v1713 = vadd.f32 %v1529, %v1712
      %v1714 = vpop.f32.mrf.mxu0
      %1715 = vmatprep.mubr.f32.mxu0 0.0
      %1716 = vmatmul.mubr.f32.gmra.mxu0 %v1500
      %v1717 = vpop.f32.mrf.mxu0
      %v1718 = vadd.f32 %v1529, %v1717
      %v1719 = vpop.f32.mrf.mxu0
      %1720 = vmatprep.mubr.f32.mxu0 0.0
      %1721 = vmatmul.mubr.f32.gmra.mxu0 %v1501
      %v1722 = vpop.f32.mrf.mxu0
      %v1723 = vadd.f32 %v1529, %v1722
      %v1724 = vpop.f32.mrf.mxu0
      %1725 = vmatprep.mubr.f32.mxu0 0.0
      %1726 = vmatmul.mubr.f32.gmra.mxu0 %v1502
      %v1727 = vpop.f32.mrf.mxu0
      %v1728 = vadd.f32 %v1529, %v1727
      %v1729 = vpop.f32.mrf.mxu0
      %1730 = vmatprep.mubr.f32.mxu0 0.0
      %1731 = vmatmul.mubr.f32.gmra.mxu0 %v1503
      %v1732 = vpop.f32.mrf.mxu0
      %v1733 = vadd.f32 %v1529, %v1732
      %v1734 = vpop.f32.mrf.mxu0
      %1735 = vmatprep.mubr.f32.mxu0 0.0
      %1736 = vmatmul.mubr.f32.gmra.mxu0 %v1504
      %v1737 = vpop.f32.mrf.mxu0
      %v1738 = vadd.f32 %v1529, %v1737
      %v1739 = vpop.f32.mrf.mxu0
      %1740 = vmatprep.mubr.f32.mxu0 0.0
      %1741 = vmatmul.mubr.f32.gmra.mxu0 %v1505
      %v1742 = vpop.f32.mrf.mxu0
      %v1743 = vadd.f32 %v1529, %v1742
      %v1744 = vpop.f32.mrf.mxu0
      %1745 = vmatprep.mubr.f32.mxu0 0.0
      %1746 = vmatmul.mubr.f32.gmra.mxu0 %v1506
      %v1747 = vpop.f32.mrf.mxu0
      %v1748 = vadd.f32 %v1529, %v1747
      %v1749 = vpop.f32.mrf.mxu0
      %1750 = vmatprep.mubr.f32.mxu0 0.0
      %1751 = vmatmul.mubr.f32.gmra.mxu0 %v1507
      %v1752 = vpop.f32.mrf.mxu0
      %v1753 = vadd.f32 %v1529, %v1752
      %v1754 = vpop.f32.mrf.mxu0
      %1755 = vdwg.mxu0
      %vm1756 = vcmp.gt.f32.partialorder %v1598, 0.0
      %vm1757 = vcmp.gt.f32.partialorder %v1603, 0.0
      %vm1758 = vcmp.gt.f32.partialorder %v1608, 0.0
      %vm1759 = vcmp.gt.f32.partialorder %v1613, 0.0
      %vm1760 = vcmp.gt.f32.partialorder %v1618, 0.0
      %vm1761 = vcmp.gt.f32.partialorder %v1623, 0.0
      %vm1762 = vcmp.gt.f32.partialorder %v1628, 0.0
      %vm1763 = vcmp.gt.f32.partialorder %v1633, 0.0
      %vm1764 = vcmp.gt.f32.partialorder %v1638, 0.0
      %vm1765 = vcmp.gt.f32.partialorder %v1643, 0.0
      %vm1766 = vcmp.gt.f32.partialorder %v1648, 0.0
      %vm1767 = vcmp.gt.f32.partialorder %v1653, 0.0
      %vm1768 = vcmp.gt.f32.partialorder %v1658, 0.0
      %vm1769 = vcmp.gt.f32.partialorder %v1663, 0.0
      %vm1770 = vcmp.gt.f32.partialorder %v1668, 0.0
      %vm1771 = vcmp.gt.f32.partialorder %v1673, 0.0
      %vm1772 = vcmp.gt.f32.partialorder %v1678, 0.0
      %vm1773 = vcmp.gt.f32.partialorder %v1683, 0.0
      %vm1774 = vcmp.gt.f32.partialorder %v1688, 0.0
      %vm1775 = vcmp.gt.f32.partialorder %v1693, 0.0
      %vm1776 = vcmp.gt.f32.partialorder %v1698, 0.0
      %vm1777 = vcmp.gt.f32.partialorder %v1703, 0.0
      %vm1778 = vcmp.gt.f32.partialorder %v1708, 0.0
      %vm1779 = vcmp.gt.f32.partialorder %v1713, 0.0
      %vm1780 = vcmp.gt.f32.partialorder %v1718, 0.0
      %vm1781 = vcmp.gt.f32.partialorder %v1723, 0.0
      %vm1782 = vcmp.gt.f32.partialorder %v1728, 0.0
      %vm1783 = vcmp.gt.f32.partialorder %v1733, 0.0
      %vm1784 = vcmp.gt.f32.partialorder %v1738, 0.0
      %vm1785 = vcmp.gt.f32.partialorder %v1743, 0.0
      %vm1786 = vcmp.gt.f32.partialorder %v1748, 0.0
      %vm1787 = vcmp.gt.f32.partialorder %v1753, 0.0
      %v1788 = vmul.f32 %v1598, 0.01
      %v1789 = vmul.f32 %v1603, 0.01
      %v1790 = vmul.f32 %v1608, 0.01
      %v1791 = vmul.f32 %v1613, 0.01
      %v1792 = vmul.f32 %v1618, 0.01
      %v1793 = vmul.f32 %v1623, 0.01
      %v1794 = vmul.f32 %v1628, 0.01
      %v1795 = vmul.f32 %v1633, 0.01
      %v1796 = vmul.f32 %v1638, 0.01
      %v1797 = vmul.f32 %v1643, 0.01
      %v1798 = vmul.f32 %v1648, 0.01
      %v1799 = vmul.f32 %v1653, 0.01
      %v1800 = vmul.f32 %v1658, 0.01
      %v1801 = vmul.f32 %v1663, 0.01
      %v1802 = vmul.f32 %v1668, 0.01
      %v1803 = vmul.f32 %v1673, 0.01
      %v1804 = vmul.f32 %v1678, 0.01
      %v1805 = vmul.f32 %v1683, 0.01
      %v1806 = vmul.f32 %v1688, 0.01
      %v1807 = vmul.f32 %v1693, 0.01
      %v1808 = vmul.f32 %v1698, 0.01
      %v1809 = vmul.f32 %v1703, 0.01
      %v1810 = vmul.f32 %v1708, 0.01
      %v1811 = vmul.f32 %v1713, 0.01
      %v1812 = vmul.f32 %v1718, 0.01
      %v1813 = vmul.f32 %v1723, 0.01
      %v1814 = vmul.f32 %v1728, 0.01
      %v1815 = vmul.f32 %v1733, 0.01
      %v1816 = vmul.f32 %v1738, 0.01
      %v1817 = vmul.f32 %v1743, 0.01
      %v1818 = vmul.f32 %v1748, 0.01
      %v1819 = vmul.f32 %v1753, 0.01
      %v1820 = vsel %vm1756, %v1598, %v1788
      %v1821 = vsel %vm1757, %v1603, %v1789
      %v1822 = vsel %vm1758, %v1608, %v1790
      %v1823 = vsel %vm1759, %v1613, %v1791
      %v1824 = vsel %vm1760, %v1618, %v1792
      %v1825 = vsel %vm1761, %v1623, %v1793
      %v1826 = vsel %vm1762, %v1628, %v1794
      %v1827 = vsel %vm1763, %v1633, %v1795
      %v1828 = vsel %vm1764, %v1638, %v1796
      %v1829 = vsel %vm1765, %v1643, %v1797
      %v1830 = vsel %vm1766, %v1648, %v1798
      %v1831 = vsel %vm1767, %v1653, %v1799
      %v1832 = vsel %vm1768, %v1658, %v1800
      %v1833 = vsel %vm1769, %v1663, %v1801
      %v1834 = vsel %vm1770, %v1668, %v1802
      %v1835 = vsel %vm1771, %v1673, %v1803
      %v1836 = vsel %vm1772, %v1678, %v1804
      %v1837 = vsel %vm1773, %v1683, %v1805
      %v1838 = vsel %vm1774, %v1688, %v1806
      %v1839 = vsel %vm1775, %v1693, %v1807
      %v1840 = vsel %vm1776, %v1698, %v1808
      %v1841 = vsel %vm1777, %v1703, %v1809
      %v1842 = vsel %vm1778, %v1708, %v1810
      %v1843 = vsel %vm1779, %v1713, %v1811
      %v1844 = vsel %vm1780, %v1718, %v1812
      %v1845 = vsel %vm1781, %v1723, %v1813
      %v1846 = vsel %vm1782, %v1728, %v1814
      %v1847 = vsel %vm1783, %v1733, %v1815
      %v1848 = vsel %vm1784, %v1738, %v1816
      %v1849 = vsel %vm1785, %v1743, %v1817
      %v1850 = vsel %vm1786, %v1748, %v1818
      %v1851 = vsel %vm1787, %v1753, %v1819
      %v1852 = vld [vmem:[%s9] sm:$0xff]
      %v1853 = vld [vmem:[%s9 + $0x8] sm:$0xff]
      %v1854 = vld [vmem:[%s9 + $0x10] sm:$0xff]
      %v1855 = vld [vmem:[%s9 + $0x18] sm:$0xff]
      %v1856 = vld [vmem:[%s9 + $0x20] sm:$0xff]
      %v1857 = vld [vmem:[%s9 + $0x28] sm:$0xff]
      %v1858 = vld [vmem:[%s9 + $0x30] sm:$0xff]
      %v1859 = vld [vmem:[%s9 + $0x38] sm:$0xff]
      %v1860 = vld [vmem:[%s9 + $0x40] sm:$0xff]
      %v1861 = vld [vmem:[%s9 + $0x48] sm:$0xff]
      %v1862 = vld [vmem:[%s9 + $0x50] sm:$0xff]
      %v1863 = vld [vmem:[%s9 + $0x58] sm:$0xff]
      %v1864 = vld [vmem:[%s9 + $0x60] sm:$0xff]
      %v1865 = vld [vmem:[%s9 + $0x68] sm:$0xff]
      %v1866 = vld [vmem:[%s9 + $0x70] sm:$0xff]
      %v1867 = vld [vmem:[%s9 + $0x78] sm:$0xff]
      %v1868 = vld [vmem:[%s10] sm:$0x1]
      %v1870 = vlaneseq
      %v1871 = vshrl.u32 %v1870, 7
      %v1872 = vsub.s32 0, %v1871
      %v1873 = vrot.slane %v1868, %v1872
      %1875 = vmatprep.subr.mxu0 0.0
      %1876 = vmatpush1.msra.mxu0 %v1867
      %1877 = vmatprep.subr.mxu0 0.0
      %1878 = vmatpush1.msra.mxu0 %v1866
      %1879 = vmatprep.subr.mxu0 0.0
      %1880 = vmatpush1.msra.mxu0 %v1865
      %1881 = vmatprep.subr.mxu0 0.0
      %1882 = vmatpush1.msra.mxu0 %v1864
      %1883 = vmatprep.subr.mxu0 0.0
      %1884 = vmatpush1.msra.mxu0 %v1863
      %1885 = vmatprep.subr.mxu0 0.0
      %1886 = vmatpush1.msra.mxu0 %v1862
      %1887 = vmatprep.subr.mxu0 0.0
      %1888 = vmatpush1.msra.mxu0 %v1861
      %1889 = vmatprep.subr.mxu0 0.0
      %1890 = vmatpush1.msra.mxu0 %v1860
      %1891 = vmatprep.subr.mxu0 0.0
      %1892 = vmatpush1.msra.mxu0 %v1859
      %1893 = vmatprep.subr.mxu0 0.0
      %1894 = vmatpush1.msra.mxu0 %v1858
      %1895 = vmatprep.subr.mxu0 0.0
      %1896 = vmatpush1.msra.mxu0 %v1857
      %1897 = vmatprep.subr.mxu0 0.0
      %1898 = vmatpush1.msra.mxu0 %v1856
      %1899 = vmatprep.subr.mxu0 0.0
      %1900 = vmatpush1.msra.mxu0 %v1855
      %1901 = vmatprep.subr.mxu0 0.0
      %1902 = vmatpush1.msra.mxu0 %v1854
      %1903 = vmatprep.subr.mxu0 0.0
      %1904 = vmatpush1.msra.mxu0 %v1853
      %1905 = vmatprep.subr.mxu0 0.0
      %1906 = vmatpush1.msra.mxu0 %v1852
      %1907 = vmatprep.subr.mxu0 0.0
      %1908 = vmatpush2.msra.mxu0 0.0
      %1909 = vmatprep.subr.mxu0 0.0
      %1910 = vmatpush2.msra.mxu0 0.0
      %1911 = vmatprep.subr.mxu0 0.0
      %1912 = vmatpush2.msra.mxu0 0.0
      %1913 = vmatprep.subr.mxu0 0.0
      %1914 = vmatpush2.msra.mxu0 0.0
      %1915 = vmatprep.subr.mxu0 0.0
      %1916 = vmatpush2.msra.mxu0 0.0
      %1917 = vmatprep.subr.mxu0 0.0
      %1918 = vmatpush2.msra.mxu0 0.0
      %1919 = vmatprep.subr.mxu0 0.0
      %1920 = vmatpush2.msra.mxu0 0.0
      %1921 = vmatprep.subr.mxu0 0.0
      %1922 = vmatpush2.msra.mxu0 0.0
      %1923 = vmatprep.subr.mxu0 0.0
      %1924 = vmatpush2.msra.mxu0 0.0
      %1925 = vmatprep.subr.mxu0 0.0
      %1926 = vmatpush2.msra.mxu0 0.0
      %1927 = vmatprep.subr.mxu0 0.0
      %1928 = vmatpush2.msra.mxu0 0.0
      %1929 = vmatprep.subr.mxu0 0.0
      %1930 = vmatpush2.msra.mxu0 0.0
      %1931 = vmatprep.subr.mxu0 0.0
      %1932 = vmatpush2.msra.mxu0 0.0
      %1933 = vmatprep.subr.mxu0 0.0
      %1934 = vmatpush2.msra.mxu0 0.0
      %1935 = vmatprep.subr.mxu0 0.0
      %1936 = vmatpush2.msra.mxu0 0.0
      %1937 = vmatprep.subr.mxu0 0.0
      %1938 = vmatpush2.msra.mxu0 0.0
      %1939 = vmatprep.mubr.f32.mxu0 0.0
      %1940 = vmatmul.mubr.f32.gmra.mxu0 %v1820
      %v1941 = vpop.f32.mrf.mxu0
      %v1942 = vadd.f32 %v1873, %v1941
      %v1943 = vpop.f32.mrf.mxu0
      %1944 = vmatprep.mubr.f32.mxu0 0.0
      %1945 = vmatmul.mubr.f32.gmra.mxu0 %v1821
      %v1946 = vpop.f32.mrf.mxu0
      %v1947 = vadd.f32 %v1873, %v1946
      %v1948 = vpop.f32.mrf.mxu0
      %1949 = vmatprep.mubr.f32.mxu0 0.0
      %1950 = vmatmul.mubr.f32.gmra.mxu0 %v1822
      %v1951 = vpop.f32.mrf.mxu0
      %v1952 = vadd.f32 %v1873, %v1951
      %v1953 = vpop.f32.mrf.mxu0
      %1954 = vmatprep.mubr.f32.mxu0 0.0
      %1955 = vmatmul.mubr.f32.gmra.mxu0 %v1823
      %v1956 = vpop.f32.mrf.mxu0
      %v1957 = vadd.f32 %v1873, %v1956
      %v1958 = vpop.f32.mrf.mxu0
      %1959 = vmatprep.mubr.f32.mxu0 0.0
      %1960 = vmatmul.mubr.f32.gmra.mxu0 %v1824
      %v1961 = vpop.f32.mrf.mxu0
      %v1962 = vadd.f32 %v1873, %v1961
      %v1963 = vpop.f32.mrf.mxu0
      %1964 = vmatprep.mubr.f32.mxu0 0.0
      %1965 = vmatmul.mubr.f32.gmra.mxu0 %v1825
      %v1966 = vpop.f32.mrf.mxu0
      %v1967 = vadd.f32 %v1873, %v1966
      %v1968 = vpop.f32.mrf.mxu0
      %1969 = vmatprep.mubr.f32.mxu0 0.0
      %1970 = vmatmul.mubr.f32.gmra.mxu0 %v1826
      %v1971 = vpop.f32.mrf.mxu0
      %v1972 = vadd.f32 %v1873, %v1971
      %v1973 = vpop.f32.mrf.mxu0
      %1974 = vmatprep.mubr.f32.mxu0 0.0
      %1975 = vmatmul.mubr.f32.gmra.mxu0 %v1827
      %v1976 = vpop.f32.mrf.mxu0
      %v1977 = vadd.f32 %v1873, %v1976
      %v1978 = vpop.f32.mrf.mxu0
      %1979 = vmatprep.mubr.f32.mxu0 0.0
      %1980 = vmatmul.mubr.f32.gmra.mxu0 %v1828
      %v1981 = vpop.f32.mrf.mxu0
      %v1982 = vadd.f32 %v1873, %v1981
      %v1983 = vpop.f32.mrf.mxu0
      %1984 = vmatprep.mubr.f32.mxu0 0.0
      %1985 = vmatmul.mubr.f32.gmra.mxu0 %v1829
      %v1986 = vpop.f32.mrf.mxu0
      %v1987 = vadd.f32 %v1873, %v1986
      %v1988 = vpop.f32.mrf.mxu0
      %1989 = vmatprep.mubr.f32.mxu0 0.0
      %1990 = vmatmul.mubr.f32.gmra.mxu0 %v1830
      %v1991 = vpop.f32.mrf.mxu0
      %v1992 = vadd.f32 %v1873, %v1991
      %v1993 = vpop.f32.mrf.mxu0
      %1994 = vmatprep.mubr.f32.mxu0 0.0
      %1995 = vmatmul.mubr.f32.gmra.mxu0 %v1831
      %v1996 = vpop.f32.mrf.mxu0
      %v1997 = vadd.f32 %v1873, %v1996
      %v1998 = vpop.f32.mrf.mxu0
      %1999 = vmatprep.mubr.f32.mxu0 0.0
      %2000 = vmatmul.mubr.f32.gmra.mxu0 %v1832
      %v2001 = vpop.f32.mrf.mxu0
      %v2002 = vadd.f32 %v1873, %v2001
      %v2003 = vpop.f32.mrf.mxu0
      %2004 = vmatprep.mubr.f32.mxu0 0.0
      %2005 = vmatmul.mubr.f32.gmra.mxu0 %v1833
      %v2006 = vpop.f32.mrf.mxu0
      %v2007 = vadd.f32 %v1873, %v2006
      %v2008 = vpop.f32.mrf.mxu0
      %2009 = vmatprep.mubr.f32.mxu0 0.0
      %2010 = vmatmul.mubr.f32.gmra.mxu0 %v1834
      %v2011 = vpop.f32.mrf.mxu0
      %v2012 = vadd.f32 %v1873, %v2011
      %v2013 = vpop.f32.mrf.mxu0
      %2014 = vmatprep.mubr.f32.mxu0 0.0
      %2015 = vmatmul.mubr.f32.gmra.mxu0 %v1835
      %v2016 = vpop.f32.mrf.mxu0
      %v2017 = vadd.f32 %v1873, %v2016
      %v2018 = vpop.f32.mrf.mxu0
      %2019 = vmatprep.mubr.f32.mxu0 0.0
      %2020 = vmatmul.mubr.f32.gmra.mxu0 %v1836
      %v2021 = vpop.f32.mrf.mxu0
      %v2022 = vadd.f32 %v1873, %v2021
      %v2023 = vpop.f32.mrf.mxu0
      %2024 = vmatprep.mubr.f32.mxu0 0.0
      %2025 = vmatmul.mubr.f32.gmra.mxu0 %v1837
      %v2026 = vpop.f32.mrf.mxu0
      %v2027 = vadd.f32 %v1873, %v2026
      %v2028 = vpop.f32.mrf.mxu0
      %2029 = vmatprep.mubr.f32.mxu0 0.0
      %2030 = vmatmul.mubr.f32.gmra.mxu0 %v1838
      %v2031 = vpop.f32.mrf.mxu0
      %v2032 = vadd.f32 %v1873, %v2031
      %v2033 = vpop.f32.mrf.mxu0
      %2034 = vmatprep.mubr.f32.mxu0 0.0
      %2035 = vmatmul.mubr.f32.gmra.mxu0 %v1839
      %v2036 = vpop.f32.mrf.mxu0
      %v2037 = vadd.f32 %v1873, %v2036
      %v2038 = vpop.f32.mrf.mxu0
      %2039 = vmatprep.mubr.f32.mxu0 0.0
      %2040 = vmatmul.mubr.f32.gmra.mxu0 %v1840
      %v2041 = vpop.f32.mrf.mxu0
      %v2042 = vadd.f32 %v1873, %v2041
      %v2043 = vpop.f32.mrf.mxu0
      %2044 = vmatprep.mubr.f32.mxu0 0.0
      %2045 = vmatmul.mubr.f32.gmra.mxu0 %v1841
      %v2046 = vpop.f32.mrf.mxu0
      %v2047 = vadd.f32 %v1873, %v2046
      %v2048 = vpop.f32.mrf.mxu0
      %2049 = vmatprep.mubr.f32.mxu0 0.0
      %2050 = vmatmul.mubr.f32.gmra.mxu0 %v1842
      %v2051 = vpop.f32.mrf.mxu0
      %v2052 = vadd.f32 %v1873, %v2051
      %v2053 = vpop.f32.mrf.mxu0
      %2054 = vmatprep.mubr.f32.mxu0 0.0
      %2055 = vmatmul.mubr.f32.gmra.mxu0 %v1843
      %v2056 = vpop.f32.mrf.mxu0
      %v2057 = vadd.f32 %v1873, %v2056
      %v2058 = vpop.f32.mrf.mxu0
      %2059 = vmatprep.mubr.f32.mxu0 0.0
      %2060 = vmatmul.mubr.f32.gmra.mxu0 %v1844
      %v2061 = vpop.f32.mrf.mxu0
      %v2062 = vadd.f32 %v1873, %v2061
      %v2063 = vpop.f32.mrf.mxu0
      %2064 = vmatprep.mubr.f32.mxu0 0.0
      %2065 = vmatmul.mubr.f32.gmra.mxu0 %v1845
      %v2066 = vpop.f32.mrf.mxu0
      %v2067 = vadd.f32 %v1873, %v2066
      %v2068 = vpop.f32.mrf.mxu0
      %2069 = vmatprep.mubr.f32.mxu0 0.0
      %2070 = vmatmul.mubr.f32.gmra.mxu0 %v1846
      %v2071 = vpop.f32.mrf.mxu0
      %v2072 = vadd.f32 %v1873, %v2071
      %v2073 = vpop.f32.mrf.mxu0
      %2074 = vmatprep.mubr.f32.mxu0 0.0
      %2075 = vmatmul.mubr.f32.gmra.mxu0 %v1847
      %v2076 = vpop.f32.mrf.mxu0
      %v2077 = vadd.f32 %v1873, %v2076
      %v2078 = vpop.f32.mrf.mxu0
      %2079 = vmatprep.mubr.f32.mxu0 0.0
      %2080 = vmatmul.mubr.f32.gmra.mxu0 %v1848
      %v2081 = vpop.f32.mrf.mxu0
      %v2082 = vadd.f32 %v1873, %v2081
      %v2083 = vpop.f32.mrf.mxu0
      %2084 = vmatprep.mubr.f32.mxu0 0.0
      %2085 = vmatmul.mubr.f32.gmra.mxu0 %v1849
      %v2086 = vpop.f32.mrf.mxu0
      %v2087 = vadd.f32 %v1873, %v2086
      %v2088 = vpop.f32.mrf.mxu0
      %2089 = vmatprep.mubr.f32.mxu0 0.0
      %2090 = vmatmul.mubr.f32.gmra.mxu0 %v1850
      %v2091 = vpop.f32.mrf.mxu0
      %v2092 = vadd.f32 %v1873, %v2091
      %v2093 = vpop.f32.mrf.mxu0
      %2094 = vmatprep.mubr.f32.mxu0 0.0
      %2095 = vmatmul.mubr.f32.gmra.mxu0 %v1851
      %v2096 = vpop.f32.mrf.mxu0
      %v2097 = vadd.f32 %v1873, %v2096
      %v2098 = vpop.f32.mrf.mxu0
      %2099 = vdwg.mxu0
      %v2100 = vld [vmem:[%s11] sm:$0xff]
      %v2101 = vld [vmem:[%s11 + $0x8] sm:$0xff]
      %v2102 = vld [vmem:[%s11 + $0x10] sm:$0xff]
      %v2103 = vld [vmem:[%s11 + $0x18] sm:$0xff]
      %v2104 = vld [vmem:[%s11 + $0x20] sm:$0xff]
      %v2105 = vld [vmem:[%s11 + $0x28] sm:$0xff]
      %v2106 = vld [vmem:[%s11 + $0x30] sm:$0xff]
      %v2107 = vld [vmem:[%s11 + $0x38] sm:$0xff]
      %v2108 = vld [vmem:[%s11 + $0x40] sm:$0xff]
      %v2109 = vld [vmem:[%s11 + $0x48] sm:$0xff]
      %v2110 = vld [vmem:[%s11 + $0x50] sm:$0xff]
      %v2111 = vld [vmem:[%s11 + $0x58] sm:$0xff]
      %v2112 = vld [vmem:[%s11 + $0x60] sm:$0xff]
      %v2113 = vld [vmem:[%s11 + $0x68] sm:$0xff]
      %v2114 = vld [vmem:[%s11 + $0x70] sm:$0xff]
      %v2115 = vld [vmem:[%s11 + $0x78] sm:$0xff]
      %v2116 = vld [vmem:[%s12] sm:$0x1]
      %v2118 = vlaneseq
      %v2119 = vshrl.u32 %v2118, 7
      %v2120 = vsub.s32 0, %v2119
      %v2121 = vrot.slane %v2116, %v2120
      %2123 = vmatprep.subr.mxu0 0.0
      %2124 = vmatpush1.msra.mxu0 %v2115
      %2125 = vmatprep.subr.mxu0 0.0
      %2126 = vmatpush1.msra.mxu0 %v2114
      %2127 = vmatprep.subr.mxu0 0.0
      %2128 = vmatpush1.msra.mxu0 %v2113
      %2129 = vmatprep.subr.mxu0 0.0
      %2130 = vmatpush1.msra.mxu0 %v2112
      %2131 = vmatprep.subr.mxu0 0.0
      %2132 = vmatpush1.msra.mxu0 %v2111
      %2133 = vmatprep.subr.mxu0 0.0
      %2134 = vmatpush1.msra.mxu0 %v2110
      %2135 = vmatprep.subr.mxu0 0.0
      %2136 = vmatpush1.msra.mxu0 %v2109
      %2137 = vmatprep.subr.mxu0 0.0
      %2138 = vmatpush1.msra.mxu0 %v2108
      %2139 = vmatprep.subr.mxu0 0.0
      %2140 = vmatpush1.msra.mxu0 %v2107
      %2141 = vmatprep.subr.mxu0 0.0
      %2142 = vmatpush1.msra.mxu0 %v2106
      %2143 = vmatprep.subr.mxu0 0.0
      %2144 = vmatpush1.msra.mxu0 %v2105
      %2145 = vmatprep.subr.mxu0 0.0
      %2146 = vmatpush1.msra.mxu0 %v2104
      %2147 = vmatprep.subr.mxu0 0.0
      %2148 = vmatpush1.msra.mxu0 %v2103
      %2149 = vmatprep.subr.mxu0 0.0
      %2150 = vmatpush1.msra.mxu0 %v2102
      %2151 = vmatprep.subr.mxu0 0.0
      %2152 = vmatpush1.msra.mxu0 %v2101
      %2153 = vmatprep.subr.mxu0 0.0
      %2154 = vmatpush1.msra.mxu0 %v2100
      %2155 = vmatprep.subr.mxu0 0.0
      %2156 = vmatpush2.msra.mxu0 0.0
      %2157 = vmatprep.subr.mxu0 0.0
      %2158 = vmatpush2.msra.mxu0 0.0
      %2159 = vmatprep.subr.mxu0 0.0
      %2160 = vmatpush2.msra.mxu0 0.0
      %2161 = vmatprep.subr.mxu0 0.0
      %2162 = vmatpush2.msra.mxu0 0.0
      %2163 = vmatprep.subr.mxu0 0.0
      %2164 = vmatpush2.msra.mxu0 0.0
      %2165 = vmatprep.subr.mxu0 0.0
      %2166 = vmatpush2.msra.mxu0 0.0
      %2167 = vmatprep.subr.mxu0 0.0
      %2168 = vmatpush2.msra.mxu0 0.0
      %2169 = vmatprep.subr.mxu0 0.0
      %2170 = vmatpush2.msra.mxu0 0.0
      %2171 = vmatprep.subr.mxu0 0.0
      %2172 = vmatpush2.msra.mxu0 0.0
      %2173 = vmatprep.subr.mxu0 0.0
      %2174 = vmatpush2.msra.mxu0 0.0
      %2175 = vmatprep.subr.mxu0 0.0
      %2176 = vmatpush2.msra.mxu0 0.0
      %2177 = vmatprep.subr.mxu0 0.0
      %2178 = vmatpush2.msra.mxu0 0.0
      %2179 = vmatprep.subr.mxu0 0.0
      %2180 = vmatpush2.msra.mxu0 0.0
      %2181 = vmatprep.subr.mxu0 0.0
      %2182 = vmatpush2.msra.mxu0 0.0
      %2183 = vmatprep.subr.mxu0 0.0
      %2184 = vmatpush2.msra.mxu0 0.0
      %2185 = vmatprep.subr.mxu0 0.0
      %2186 = vmatpush2.msra.mxu0 0.0
      %2187 = vmatprep.mubr.f32.mxu0 0.0
      %2188 = vmatmul.mubr.f32.gmra.mxu0 %v1942
      %v2189 = vpop.f32.mrf.mxu0
      %v2190 = vadd.f32 %v2121, %v2189
      %v2191 = vpop.f32.mrf.mxu0
      %2192 = vmatprep.mubr.f32.mxu0 0.0
      %2193 = vmatmul.mubr.f32.gmra.mxu0 %v1947
      %v2194 = vpop.f32.mrf.mxu0
      %v2195 = vadd.f32 %v2121, %v2194
      %v2196 = vpop.f32.mrf.mxu0
      %2197 = vmatprep.mubr.f32.mxu0 0.0
      %2198 = vmatmul.mubr.f32.gmra.mxu0 %v1952
      %v2199 = vpop.f32.mrf.mxu0
      %v2200 = vadd.f32 %v2121, %v2199
      %v2201 = vpop.f32.mrf.mxu0
      %2202 = vmatprep.mubr.f32.mxu0 0.0
      %2203 = vmatmul.mubr.f32.gmra.mxu0 %v1957
      %v2204 = vpop.f32.mrf.mxu0
      %v2205 = vadd.f32 %v2121, %v2204
      %v2206 = vpop.f32.mrf.mxu0
      %2207 = vmatprep.mubr.f32.mxu0 0.0
      %2208 = vmatmul.mubr.f32.gmra.mxu0 %v1962
      %v2209 = vpop.f32.mrf.mxu0
      %v2210 = vadd.f32 %v2121, %v2209
      %v2211 = vpop.f32.mrf.mxu0
      %2212 = vmatprep.mubr.f32.mxu0 0.0
      %2213 = vmatmul.mubr.f32.gmra.mxu0 %v1967
      %v2214 = vpop.f32.mrf.mxu0
      %v2215 = vadd.f32 %v2121, %v2214
      %v2216 = vpop.f32.mrf.mxu0
      %2217 = vmatprep.mubr.f32.mxu0 0.0
      %2218 = vmatmul.mubr.f32.gmra.mxu0 %v1972
      %v2219 = vpop.f32.mrf.mxu0
      %v2220 = vadd.f32 %v2121, %v2219
      %v2221 = vpop.f32.mrf.mxu0
      %2222 = vmatprep.mubr.f32.mxu0 0.0
      %2223 = vmatmul.mubr.f32.gmra.mxu0 %v1977
      %v2224 = vpop.f32.mrf.mxu0
      %v2225 = vadd.f32 %v2121, %v2224
      %v2226 = vpop.f32.mrf.mxu0
      %2227 = vmatprep.mubr.f32.mxu0 0.0
      %2228 = vmatmul.mubr.f32.gmra.mxu0 %v1982
      %v2229 = vpop.f32.mrf.mxu0
      %v2230 = vadd.f32 %v2121, %v2229
      %v2231 = vpop.f32.mrf.mxu0
      %2232 = vmatprep.mubr.f32.mxu0 0.0
      %2233 = vmatmul.mubr.f32.gmra.mxu0 %v1987
      %v2234 = vpop.f32.mrf.mxu0
      %v2235 = vadd.f32 %v2121, %v2234
      %v2236 = vpop.f32.mrf.mxu0
      %2237 = vmatprep.mubr.f32.mxu0 0.0
      %2238 = vmatmul.mubr.f32.gmra.mxu0 %v1992
      %v2239 = vpop.f32.mrf.mxu0
      %v2240 = vadd.f32 %v2121, %v2239
      %v2241 = vpop.f32.mrf.mxu0
      %2242 = vmatprep.mubr.f32.mxu0 0.0
      %2243 = vmatmul.mubr.f32.gmra.mxu0 %v1997
      %v2244 = vpop.f32.mrf.mxu0
      %v2245 = vadd.f32 %v2121, %v2244
      %v2246 = vpop.f32.mrf.mxu0
      %2247 = vmatprep.mubr.f32.mxu0 0.0
      %2248 = vmatmul.mubr.f32.gmra.mxu0 %v2002
      %v2249 = vpop.f32.mrf.mxu0
      %v2250 = vadd.f32 %v2121, %v2249
      %v2251 = vpop.f32.mrf.mxu0
      %2252 = vmatprep.mubr.f32.mxu0 0.0
      %2253 = vmatmul.mubr.f32.gmra.mxu0 %v2007
      %v2254 = vpop.f32.mrf.mxu0
      %v2255 = vadd.f32 %v2121, %v2254
      %v2256 = vpop.f32.mrf.mxu0
      %2257 = vmatprep.mubr.f32.mxu0 0.0
      %2258 = vmatmul.mubr.f32.gmra.mxu0 %v2012
      %v2259 = vpop.f32.mrf.mxu0
      %v2260 = vadd.f32 %v2121, %v2259
      %v2261 = vpop.f32.mrf.mxu0
      %2262 = vmatprep.mubr.f32.mxu0 0.0
      %2263 = vmatmul.mubr.f32.gmra.mxu0 %v2017
      %v2264 = vpop.f32.mrf.mxu0
      %v2265 = vadd.f32 %v2121, %v2264
      %v2266 = vpop.f32.mrf.mxu0
      %2267 = vmatprep.mubr.f32.mxu0 0.0
      %2268 = vmatmul.mubr.f32.gmra.mxu0 %v2022
      %v2269 = vpop.f32.mrf.mxu0
      %v2270 = vadd.f32 %v2121, %v2269
      %v2271 = vpop.f32.mrf.mxu0
      %2272 = vmatprep.mubr.f32.mxu0 0.0
      %2273 = vmatmul.mubr.f32.gmra.mxu0 %v2027
      %v2274 = vpop.f32.mrf.mxu0
      %v2275 = vadd.f32 %v2121, %v2274
      %v2276 = vpop.f32.mrf.mxu0
      %2277 = vmatprep.mubr.f32.mxu0 0.0
      %2278 = vmatmul.mubr.f32.gmra.mxu0 %v2032
      %v2279 = vpop.f32.mrf.mxu0
      %v2280 = vadd.f32 %v2121, %v2279
      %v2281 = vpop.f32.mrf.mxu0
      %2282 = vmatprep.mubr.f32.mxu0 0.0
      %2283 = vmatmul.mubr.f32.gmra.mxu0 %v2037
      %v2284 = vpop.f32.mrf.mxu0
      %v2285 = vadd.f32 %v2121, %v2284
      %v2286 = vpop.f32.mrf.mxu0
      %2287 = vmatprep.mubr.f32.mxu0 0.0
      %2288 = vmatmul.mubr.f32.gmra.mxu0 %v2042
      %v2289 = vpop.f32.mrf.mxu0
      %v2290 = vadd.f32 %v2121, %v2289
      %v2291 = vpop.f32.mrf.mxu0
      %2292 = vmatprep.mubr.f32.mxu0 0.0
      %2293 = vmatmul.mubr.f32.gmra.mxu0 %v2047
      %v2294 = vpop.f32.mrf.mxu0
      %v2295 = vadd.f32 %v2121, %v2294
      %v2296 = vpop.f32.mrf.mxu0
      %2297 = vmatprep.mubr.f32.mxu0 0.0
      %2298 = vmatmul.mubr.f32.gmra.mxu0 %v2052
      %v2299 = vpop.f32.mrf.mxu0
      %v2300 = vadd.f32 %v2121, %v2299
      %v2301 = vpop.f32.mrf.mxu0
      %2302 = vmatprep.mubr.f32.mxu0 0.0
      %2303 = vmatmul.mubr.f32.gmra.mxu0 %v2057
      %v2304 = vpop.f32.mrf.mxu0
      %v2305 = vadd.f32 %v2121, %v2304
      %v2306 = vpop.f32.mrf.mxu0
      %2307 = vmatprep.mubr.f32.mxu0 0.0
      %2308 = vmatmul.mubr.f32.gmra.mxu0 %v2062
      %v2309 = vpop.f32.mrf.mxu0
      %v2310 = vadd.f32 %v2121, %v2309
      %v2311 = vpop.f32.mrf.mxu0
      %2312 = vmatprep.mubr.f32.mxu0 0.0
      %2313 = vmatmul.mubr.f32.gmra.mxu0 %v2067
      %v2314 = vpop.f32.mrf.mxu0
      %v2315 = vadd.f32 %v2121, %v2314
      %v2316 = vpop.f32.mrf.mxu0
      %2317 = vmatprep.mubr.f32.mxu0 0.0
      %2318 = vmatmul.mubr.f32.gmra.mxu0 %v2072
      %v2319 = vpop.f32.mrf.mxu0
      %v2320 = vadd.f32 %v2121, %v2319
      %v2321 = vpop.f32.mrf.mxu0
      %2322 = vmatprep.mubr.f32.mxu0 0.0
      %2323 = vmatmul.mubr.f32.gmra.mxu0 %v2077
      %v2324 = vpop.f32.mrf.mxu0
      %v2325 = vadd.f32 %v2121, %v2324
      %v2326 = vpop.f32.mrf.mxu0
      %2327 = vmatprep.mubr.f32.mxu0 0.0
      %2328 = vmatmul.mubr.f32.gmra.mxu0 %v2082
      %v2329 = vpop.f32.mrf.mxu0
      %v2330 = vadd.f32 %v2121, %v2329
      %v2331 = vpop.f32.mrf.mxu0
      %2332 = vmatprep.mubr.f32.mxu0 0.0
      %2333 = vmatmul.mubr.f32.gmra.mxu0 %v2087
      %v2334 = vpop.f32.mrf.mxu0
      %v2335 = vadd.f32 %v2121, %v2334
      %v2336 = vpop.f32.mrf.mxu0
      %2337 = vmatprep.mubr.f32.mxu0 0.0
      %2338 = vmatmul.mubr.f32.gmra.mxu0 %v2092
      %v2339 = vpop.f32.mrf.mxu0
      %v2340 = vadd.f32 %v2121, %v2339
      %v2341 = vpop.f32.mrf.mxu0
      %2342 = vmatprep.mubr.f32.mxu0 0.0
      %2343 = vmatmul.mubr.f32.gmra.mxu0 %v2097
      %v2344 = vpop.f32.mrf.mxu0
      %v2345 = vadd.f32 %v2121, %v2344
      %v2346 = vpop.f32.mrf.mxu0
      %2347 = vdwg.mxu0
      %2348 = vst [vmem:[%s442] sm:$0xff] %v2190
      %2349 = vst [vmem:[%s442 + $0x8] sm:$0xff] %v2195
      %2350 = vst [vmem:[%s442 + $0x10] sm:$0xff] %v2200
      %2351 = vst [vmem:[%s442 + $0x18] sm:$0xff] %v2205
      %2352 = vst [vmem:[%s442 + $0x20] sm:$0xff] %v2210
      %2353 = vst [vmem:[%s442 + $0x28] sm:$0xff] %v2215
      %2354 = vst [vmem:[%s442 + $0x30] sm:$0xff] %v2220
      %2355 = vst [vmem:[%s442 + $0x38] sm:$0xff] %v2225
      %2356 = vst [vmem:[%s442 + $0x40] sm:$0xff] %v2230
      %2357 = vst [vmem:[%s442 + $0x48] sm:$0xff] %v2235
      %2358 = vst [vmem:[%s442 + $0x50] sm:$0xff] %v2240
      %2359 = vst [vmem:[%s442 + $0x58] sm:$0xff] %v2245
      %2360 = vst [vmem:[%s442 + $0x60] sm:$0xff] %v2250
      %2361 = vst [vmem:[%s442 + $0x68] sm:$0xff] %v2255
      %2362 = vst [vmem:[%s442 + $0x70] sm:$0xff] %v2260
      %2363 = vst [vmem:[%s442 + $0x78] sm:$0xff] %v2265
      %2364 = vst [vmem:[%s442 + $0x80] sm:$0xff] %v2270
      %2365 = vst [vmem:[%s442 + $0x88] sm:$0xff] %v2275
      %2366 = vst [vmem:[%s442 + $0x90] sm:$0xff] %v2280
      %2367 = vst [vmem:[%s442 + $0x98] sm:$0xff] %v2285
      %2368 = vst [vmem:[%s442 + $0xa0] sm:$0xff] %v2290
      %2369 = vst [vmem:[%s442 + $0xa8] sm:$0xff] %v2295
      %2370 = vst [vmem:[%s442 + $0xb0] sm:$0xff] %v2300
      %2371 = vst [vmem:[%s442 + $0xb8] sm:$0xff] %v2305
      %2372 = vst [vmem:[%s442 + $0xc0] sm:$0xff] %v2310
      %2373 = vst [vmem:[%s442 + $0xc8] sm:$0xff] %v2315
      %2374 = vst [vmem:[%s442 + $0xd0] sm:$0xff] %v2320
      %2375 = vst [vmem:[%s442 + $0xd8] sm:$0xff] %v2325
      %2376 = vst [vmem:[%s442 + $0xe0] sm:$0xff] %v2330
      %2377 = vst [vmem:[%s442 + $0xe8] sm:$0xff] %v2335
      %2378 = vst [vmem:[%s442 + $0xf0] sm:$0xff] %v2340
      %2379 = vst [vmem:[%s442 + $0xf8] sm:$0xff] %v2345
      %s2380 = smul.u32 32, %s24
      %p2381 = scmp.lt.s32.totalorder %s2380, 63
      %s2382 = scalar_select %p2381, %s2380, 63
      %s2383 = smul.addr %s2382, 8
      %s2384 = scalar_lea.vmem %s13, %s2383
      // Predicated region
      $region73: #{dueling_dqn_forward.1} parent=71 // pred_check
        %p2385 = pneg %p320
      $region74: #{dueling_dqn_forward.1} parent=71 // pred_check_branch
        %2387 = sbr.rel (%p2385) target = $region76
      $region75: #{dueling_dqn_forward.1} parent=71 // pred_region
        %s2388 = smul.u32 32, %s24
      $region76: #{dueling_dqn_forward.1} parent=71 // pred_fallthru
        _
    $region72: #{dueling_dqn_forward.1} parent=5 // pred_fallthru
      _
    %p2389 = scmp.le.s32.totalorder 2, %s19
    // Predicated region
    $region77: #{dueling_dqn_forward.1} parent=5 // pred_check
      %p2390 = pneg %p2389
    $region78: #{dueling_dqn_forward.1} parent=5 // pred_check_branch
      %2392 = sbr.rel (%p2390) target = $region80
    $region79: #{dueling_dqn_forward.1} parent=5 // pred_region
      %s2393 = ssub.s32 %s19, 2
      // Predicated region
      $region81: #{dueling_dqn_forward.1} parent=79 // pred_check
        %p2394 = pneg %p326
      $region82: #{dueling_dqn_forward.1} parent=79 // pred_check_branch
        %2396 = sbr.rel (%p2394) target = $region84
      $region83: #{dueling_dqn_forward.1} parent=79 // pred_region
        %s2397 = smul.u32 32, %s25
        %p2398 = scmp.lt.s32.totalorder %s2397, 63
        %s2399 = scalar_select %p2398, %s2397, 63
        %s2400 = smul.addr %s2399, 8
        %s2401 = scalar_lea.vmem %s13, %s2400
      $region84: #{dueling_dqn_forward.1} parent=79 // pred_fallthru
        _
    $region80: #{dueling_dqn_forward.1} parent=5 // pred_fallthru
      _
  $region6: #{dueling_dqn_forward.1} parent=0 // loop_footer
    %s23 = sadd.s32 1, %s19
  $region7: #{dueling_dqn_forward.1} parent=0 // loop_footer_branch
    %18 = sbr.rel target = $region3
  $region8: #{dueling_dqn_forward.1} parent=0 // loop_exit
    _

</llo_original>
